<compile_context>
chip_gen: v7x
topology: tpu7x:2x2x1
jax: 0.10.0
libtpu: 0.0.40
codegen_flags: <defaults>
</compile_context>

<pallas_src>
import math
import functools

import jax
import jax.numpy as jnp
from jax.experimental import pallas as pl
from jax.experimental.pallas import tpu as pltpu


_VMEM_LIMIT = 48 * 1024 * 1024  # fits v7x (64 MiB) with headroom; fine on v5e/v6e


def _cparams(*dims):
    return pltpu.CompilerParams(dimension_semantics=tuple(dims),
                                vmem_limit_bytes=_VMEM_LIMIT)


def _choose_row_tile(m):
    """Largest power-of-two row tile (<=512) that divides m exactly (no padding)."""
    for t in (512, 256, 128, 64, 32, 16, 8):
        if m % t == 0:
            return t
    return m  # degenerate fallback: single full-extent block


def _choose_col_tile(n, candidates=(2048, 1024, 512, 256, 128)):
    for c in candidates:
        if n >= c and n % c == 0:
            return c
    return n


# ----------------------------------------------------------------------------
# Pallas kernels
# ----------------------------------------------------------------------------

def _ln_qkv_kernel(x_ref, g_ref, b_ref, w_ref, bias_ref, o_ref, *, eps):
    # torch-style LayerNorm (unbiased std, eps added to std) fused with the
    # concatenated QKV projection.  1/sqrt(d_k) is pre-folded into Wq/bq.
    x = x_ref[...]                                            # (TM, D) f32
    n = x.shape[-1]
    mean = jnp.mean(x, axis=-1, keepdims=True)
    d = x - mean
    var_unb = jnp.sum(d * d, axis=-1, keepdims=True) / (n - 1)
    xn = g_ref[...] * d / (jnp.sqrt(var_unb) + eps) + b_ref[...]
    acc = jnp.dot(xn.astype(jnp.bfloat16), w_ref[...],
                  preferred_element_type=jnp.float32) + bias_ref[...]
    o_ref[...] = acc.astype(o_ref.dtype)                      # bf16 QKV output


def _attn_proj_res_kernel(q_ref, k_ref, v_ref, m_ref, x_ref, wo_ref, bo_ref, o_ref):
    # Fused: softmax(Q K^T masked) @ V for all heads of one batch element,
    # followed by the Wo output projection (applied head-by-head, so the
    # per-head context never needs a transpose) and the residual add.
    q = q_ref[0]                                              # (H, S, dk) bf16
    k = k_ref[0]
    v = v_ref[0]
    s = jnp.einsum("hqd,hkd->hqk", q, k, preferred_element_type=jnp.float32)
    s = jnp.where(m_ref[0][None, :, :] == 0, -1e20, s)        # masked_fill(mask==0,-1e20)
    s = s - jnp.max(s, axis=-1, keepdims=True)                # stable softmax (f32)
    p = jnp.exp(s)
    p = p * pl.reciprocal(jnp.sum(p, axis=-1, keepdims=True), approx=True)
    ctx = jnp.einsum("hqk,hkd->hqd", p.astype(jnp.bfloat16), v,
                     preferred_element_type=jnp.float32)      # (H, S, dk) f32

    acc = x_ref[...] + bo_ref[...]                            # residual + bias (f32)
    num_heads = q.shape[0]
    for h in range(num_heads):                                # Wo applied per head
        acc = acc + jnp.dot(ctx[h].astype(jnp.bfloat16), wo_ref[h],
                            preferred_element_type=jnp.float32)
    o_ref[...] = acc


def _ln_ffn_residual_kernel(x_ref, g_ref, b_ref, w1_ref, b1_ref, w2_ref, b2_ref,
                            o_ref, xn_sc, acc_sc, *, eps):
    # o = x + W2(relu(W1(LN(x)))) with the FFN hidden dim tiled on grid axis 1
    # (f32 accumulator, bf16 MXU inputs).  Dropout == identity in eval mode.
    kk = pl.program_id(1)

    @pl.when(kk == 0)
    def _():
        x = x_ref[...]
        n = x.shape[-1]
        mean = jnp.mean(x, axis=-1, keepdims=True)
        d = x - mean
        var_unb = jnp.sum(d * d, axis=-1, keepdims=True) / (n - 1)
        xn = g_ref[...] * d / (jnp.sqrt(var_unb) + eps) + b_ref[...]
        xn_sc[...] = xn.astype(jnp.bfloat16)
        acc_sc[...] = jnp.zeros_like(acc_sc)

    h = jnp.dot(xn_sc[...], w1_ref[...],
                preferred_element_type=jnp.float32) + b1_ref[...]
    h = jnp.maximum(h, 0.0)
    acc_sc[...] += jnp.dot(h.astype(jnp.bfloat16), w2_ref[...],
                           preferred_element_type=jnp.float32)

    @pl.when(kk == pl.num_programs(1) - 1)
    def _():
        o_ref[...] = x_ref[...] + acc_sc[...] + b2_ref[...]


def _final_head_kernel(x_ref, g_ref, b_ref, w1_ref, b1_ref, w2_ref, b2_ref,
                       logits_ref, xf_ref, h_sc, *, eps):
    # nn.LayerNorm + Linear(D,D) + Linear(D,V), vocab dim tiled on grid axis 1.
    j = pl.program_id(1)

    @pl.when(j == 0)
    def _():
        x = x_ref[...]
        mean = jnp.mean(x, axis=-1, keepdims=True)
        d = x - mean
        var = jnp.mean(d * d, axis=-1, keepdims=True)
        xf = d * jax.lax.rsqrt(var + eps) * g_ref[...] + b_ref[...]
        xf_ref[...] = xf
        h = jnp.dot(xf.astype(jnp.bfloat16), w1_ref[...],
                    preferred_element_type=jnp.float32) + b1_ref[...]
        h_sc[...] = h.astype(jnp.bfloat16)

    logits_ref[...] = (jnp.dot(h_sc[...], w2_ref[...],
                               preferred_element_type=jnp.float32) + b2_ref[...])


# ----------------------------------------------------------------------------
# Pallas wrappers
# ----------------------------------------------------------------------------

def ln_qkv(x2d, g, b, w_bf16, bias, tm):
    M, D = x2d.shape
    N3 = w_bf16.shape[1]
    return pl.pallas_call(
        functools.partial(_ln_qkv_kernel, eps=1e-6),
        grid=(M // tm,),
        in_specs=[
            pl.BlockSpec((tm, D), lambda i: (i, 0)),
            pl.BlockSpec((1, D), lambda i: (0, 0)),
            pl.BlockSpec((1, D), lambda i: (0, 0)),
            pl.BlockSpec((D, N3), lambda i: (0, 0)),
            pl.BlockSpec((1, N3), lambda i: (0, 0)),
        ],
        out_specs=pl.BlockSpec((tm, N3), lambda i: (i, 0)),
        out_shape=jax.ShapeDtypeStruct((M, N3), jnp.bfloat16),
        compiler_params=_cparams("parallel"),
    )(x2d, g.reshape(1, D), b.reshape(1, D), w_bf16, bias.reshape(1, N3))


def attn_proj_residual(q, k, v, mask, x2d, wo_heads_bf16, bo):
    # q,k,v: (B,H,S,dk) bf16; mask: (B,S,S) int32 shared across heads;
    # x2d: (B*S, D) f32 residual stream; wo_heads: (H, dk, D) bf16.
    B, H, S, dk = q.shape
    M, D = x2d.shape
    return pl.pallas_call(
        _attn_proj_res_kernel,
        grid=(B,),
        in_specs=[
            pl.BlockSpec((1, H, S, dk), lambda b: (b, 0, 0, 0)),
            pl.BlockSpec((1, H, S, dk), lambda b: (b, 0, 0, 0)),
            pl.BlockSpec((1, H, S, dk), lambda b: (b, 0, 0, 0)),
            pl.BlockSpec((1, S, S), lambda b: (b, 0, 0)),
            pl.BlockSpec((S, D), lambda b: (b, 0)),
            pl.BlockSpec((H, dk, D), lambda b: (0, 0, 0)),
            pl.BlockSpec((1, D), lambda b: (0, 0)),
        ],
        out_specs=pl.BlockSpec((S, D), lambda b: (b, 0)),
        out_shape=jax.ShapeDtypeStruct((M, D), jnp.float32),
        compiler_params=_cparams("parallel"),
    )(q, k, v, mask, x2d, wo_heads_bf16, bo.reshape(1, D))


def ln_ffn_residual(x2d, g, b, w1_bf16, b1, w2_bf16, b2, tm):
    M, D = x2d.shape
    Hd = w1_bf16.shape[1]
    th = _choose_col_tile(Hd)
    return pl.pallas_call(
        functools.partial(_ln_ffn_residual_kernel, eps=1e-6),
        grid=(M // tm, Hd // th),
        in_specs=[
            pl.BlockSpec((tm, D), lambda i, k: (i, 0)),
            pl.BlockSpec((1, D), lambda i, k: (0, 0)),
            pl.BlockSpec((1, D), lambda i, k: (0, 0)),
            pl.BlockSpec((D, th), lambda i, k: (0, k)),
            pl.BlockSpec((1, th), lambda i, k: (0, k)),
            pl.BlockSpec((th, D), lambda i, k: (k, 0)),
            pl.BlockSpec((1, D), lambda i, k: (0, 0)),
        ],
        out_specs=pl.BlockSpec((tm, D), lambda i, k: (i, 0)),
        out_shape=jax.ShapeDtypeStruct((M, D), jnp.float32),
        scratch_shapes=[
            pltpu.VMEM((tm, D), jnp.bfloat16),   # cached LN(x) (bf16 MXU input)
            pltpu.VMEM((tm, D), jnp.float32),    # f32 accumulator over hidden tiles
        ],
        compiler_params=_cparams("parallel", "arbitrary"),
    )(x2d, g.reshape(1, D), b.reshape(1, D), w1_bf16, b1.reshape(1, Hd),
      w2_bf16, b2.reshape(1, D))


def final_head(x2d, g, b, w1_bf16, b1, w2_bf16, b2, tm):
    M, D = x2d.shape
    V = w2_bf16.shape[1]
    tv = _choose_col_tile(V)
    return pl.pallas_call(
        functools.partial(_final_head_kernel, eps=1e-5),
        grid=(M // tm, V // tv),
        in_specs=[
            pl.BlockSpec((tm, D), lambda i, j: (i, 0)),
            pl.BlockSpec((1, D), lambda i, j: (0, 0)),
            pl.BlockSpec((1, D), lambda i, j: (0, 0)),
            pl.BlockSpec((D, D), lambda i, j: (0, 0)),
            pl.BlockSpec((1, D), lambda i, j: (0, 0)),
            pl.BlockSpec((D, tv), lambda i, j: (0, j)),
            pl.BlockSpec((1, tv), lambda i, j: (0, j)),
        ],
        out_specs=[
            pl.BlockSpec((tm, tv), lambda i, j: (i, j)),
            pl.BlockSpec((tm, D), lambda i, j: (i, 0)),
        ],
        out_shape=(
            jax.ShapeDtypeStruct((M, V), jnp.float32),
            jax.ShapeDtypeStruct((M, D), jnp.float32),
        ),
        scratch_shapes=[pltpu.VMEM((tm, D), jnp.bfloat16)],
        compiler_params=_cparams("parallel", "arbitrary"),
    )(x2d, g.reshape(1, D), b.reshape(1, D), w1_bf16, b1.reshape(1, D),
      w2_bf16, b2.reshape(1, V))


# ----------------------------------------------------------------------------
# Parameter init (deterministic, shapes per nn.Module __init__)
# ----------------------------------------------------------------------------

def init_params(key, vocab_size, dim, depth, max_seq_len, head_num):
    def nrm(key, shape, scale=0.02):
        return (scale * jax.random.normal(key, shape)).astype(jnp.float32)

    keys = iter(jax.random.split(key, 6 + depth * 10))
    params = {
        "token_emb": nrm(next(keys), (vocab_size, dim)),
        "pos_emb": nrm(next(keys), (max_seq_len, dim)),
        "norm_g": jnp.ones((dim,), jnp.float32),
        "norm_b": jnp.zeros((dim,), jnp.float32),
        "lm_w1": nrm(next(keys), (dim, dim)),
        "lm_b1": jnp.zeros((dim,), jnp.float32),
        "lm_w2": nrm(next(keys), (dim, vocab_size)),
        "lm_b2": jnp.zeros((vocab_size,), jnp.float32),
        "layers": [],
    }
    for _ in range(depth):
        layer = {
            "wq": nrm(next(keys), (dim, dim)), "bq": jnp.zeros((dim,), jnp.float32),
            "wk": nrm(next(keys), (dim, dim)), "bk": jnp.zeros((dim,), jnp.float32),
            "wv": nrm(next(keys), (dim, dim)), "bv": jnp.zeros((dim,), jnp.float32),
            "wo": nrm(next(keys), (dim, dim)), "bo": jnp.zeros((dim,), jnp.float32),
            "ln1_g": jnp.ones((dim,), jnp.float32), "ln1_b": jnp.zeros((dim,), jnp.float32),
            "ln2_g": jnp.ones((dim,), jnp.float32), "ln2_b": jnp.zeros((dim,), jnp.float32),
            "w1": nrm(next(keys), (dim, 4 * dim)), "b1": jnp.zeros((4 * dim,), jnp.float32),
            "w2": nrm(next(keys), (4 * dim, dim)), "b2": jnp.zeros((dim,), jnp.float32),
        }
        params["layers"].append(layer)
    return params


# ----------------------------------------------------------------------------
# Forward pass (kernels do the heavy lifting; reshapes / residual stream glue)
# ----------------------------------------------------------------------------

def transformer_lm_forward(params, input_ids, input_mask, head_num):
    B, S = input_ids.shape
    V, D = params["token_emb"].shape
    H, dk = head_num, D // head_num
    scale = 1.0 / math.sqrt(dk)

    M = B * S
    tm = _choose_row_tile(M)

    # Embedding lookups (gather) kept in plain JAX glue.
    x = jnp.take(params["token_emb"], input_ids, axis=0)          # (B, S, D)
    x = x + params["pos_emb"][:S][None, :, :]                     # PositionalEmbedding
    x2d = x.reshape(M, D).astype(jnp.float32)                     # f32 residual stream

    mask = input_mask.astype(jnp.int32)                           # (B, S, S), one copy

    def to_heads(t2d):
        return t2d.reshape(B, S, H, dk).transpose(0, 2, 1, 3)     # (B, H, S, dk) bf16

    for layer in params["layers"]:
        # Fused per-layer weights: bf16 for the MXU, biases stay f32,
        # 1/sqrt(d_k) folded into the Q projection (exact reformulation).
        wqkv = jnp.concatenate([layer["wq"] * scale, layer["wk"], layer["wv"]],
                               axis=1).astype(jnp.bfloat16)
        bqkv = jnp.concatenate([layer["bq"] * scale, layer["bk"], layer["bv"]])

        # --- residual 1: x + Wo(MHA(LayerNorm(x))) ---
        qkv = ln_qkv(x2d, layer["ln1_g"], layer["ln1_b"], wqkv, bqkv, tm)   # (M,3D) bf16
        q, k, v = jnp.split(qkv, 3, axis=1)
        x2d = attn_proj_residual(
            to_heads(q), to_heads(k), to_heads(v), mask, x2d,
            layer["wo"].reshape(H, dk, D).astype(jnp.bfloat16), layer["bo"])

        # --- residual 2: x + FFN(LayerNorm(x)) ---
        x2d = ln_ffn_residual(x2d, layer["ln2_g"], layer["ln2_b"],
                              layer["w1"].astype(jnp.bfloat16), layer["b1"],
                              layer["w2"].astype(jnp.bfloat16), layer["b2"], tm)

    # final nn.LayerNorm + lm_head (Linear(D,D) -> Linear(D,V)), fused, vocab tiled
    logits2d, xf2d = final_head(x2d, params["norm_g"], params["norm_b"],
                                params["lm_w1"].astype(jnp.bfloat16), params["lm_b1"],
                                params["lm_w2"].astype(jnp.bfloat16), params["lm_b2"], tm)

    logits = logits2d.reshape(B, S, V)
    hidden = xf2d.reshape(B, S, D)
    return logits, hidden

# TODO(synk): dropout (p=0.1) is stochastic training-time behavior; implemented as
#             identity (eval mode).
# TODO(synk): for very long sequences the attention kernel should be flash-style
#             (KV-tiled with running max/sum) rather than materializing (H,S,S) scores.


# ----------------------------------------------------------------------------
# Main
# ----------------------------------------------------------------------------

if __name__ == "__main__":
    VOCAB = 64
    DIM = 32
    DEPTH = 2
    MAX_SEQ = 16
    HEADS = 4
    B, S = 2, 8

    key = jax.random.PRNGKey(0)
    kp, kid, kmask = jax.random.split(key, 3)

    params = init_params(kp, VOCAB, DIM, DEPTH, MAX_SEQ, HEADS)

    input_ids = jax.random.randint(kid, (B, S), 0, VOCAB, dtype=jnp.int32)
    # causal-style attention mask (B, S, S): 1 = attend, 0 = masked
    causal = jnp.tril(jnp.ones((S, S), jnp.int32))
    input_mask = jnp.broadcast_to(causal, (B, S, S))

    fwd = jax.jit(functools.partial(transformer_lm_forward, head_num=HEADS))
    logits, hidden = fwd(params, input_ids, input_mask)
    jax.block_until_ready((logits, hidden))

    assert logits.shape == (B, S, VOCAB)
    assert hidden.shape == (B, S, DIM)
    assert bool(jnp.all(jnp.isfinite(logits)))
    print("KERNEL_OK")
</pallas_src>

<mosaic_0001>
module attributes {stable_mosaic.version = 11 : i64} {
  func.func @_ln_qkv_kernel(%arg0: i32, %arg1: memref<16x32xf32, #tpu.memory_space<vmem>>, %arg2: memref<1x32xf32, #tpu.memory_space<vmem>>, %arg3: memref<1x32xf32, #tpu.memory_space<vmem>>, %arg4: memref<32x96xbf16, #tpu.memory_space<vmem>>, %arg5: memref<1x96xf32, #tpu.memory_space<vmem>>, %arg6: memref<16x96xbf16, #tpu.memory_space<vmem>>) attributes {dimension_semantics = [#tpu.dimension_semantics<parallel>], iteration_bounds = array<i64: 1>, scalar_prefetch = 0 : i64, scratch_operands = 0 : i64, tpu.core_type = #tpu.core_type<tc>, window_params = [{transform_indices = @transform_0, window_bounds = array<i64: 16, 32>}, {pipeline_mode = #tpu.pipeline_mode<synchronous>, transform_indices = @transform_1, window_bounds = array<i64: 1, 32>}, {pipeline_mode = #tpu.pipeline_mode<synchronous>, transform_indices = @transform_2, window_bounds = array<i64: 1, 32>}, {pipeline_mode = #tpu.pipeline_mode<synchronous>, transform_indices = @transform_3, window_bounds = array<i64: 32, 96>}, {pipeline_mode = #tpu.pipeline_mode<synchronous>, transform_indices = @transform_4, window_bounds = array<i64: 1, 96>}, {transform_indices = @transform_5, window_bounds = array<i64: 16, 96>}]} {
    %c0 = arith.constant 0 : index
    %c0_0 = arith.constant 0 : index
    %0 = vector.load %arg1[%c0, %c0_0] : memref<16x32xf32, #tpu.memory_space<vmem>>, vector<16x32xf32>
    %cst = arith.constant dense<0.000000e+00> : vector<16xf32>
    %1 = vector.multi_reduction <add>, %0, %cst [1] : vector<16x32xf32> to vector<16xf32>
    %2 = vector.shape_cast %1 : vector<16xf32> to vector<16x1xf32>
    %cst_1 = arith.constant 3.200000e+01 : f32
    %3 = vector.broadcast %cst_1 : f32 to vector<16x1xf32>
    %4 = arith.divf %2, %3 : vector<16x1xf32>
    %5 = vector.broadcast %4 : vector<16x1xf32> to vector<16x32xf32>
    %6 = arith.subf %0, %5 : vector<16x32xf32>
    %7 = arith.mulf %6, %6 : vector<16x32xf32>
    %cst_2 = arith.constant dense<0.000000e+00> : vector<16xf32>
    %8 = vector.multi_reduction <add>, %7, %cst_2 [1] : vector<16x32xf32> to vector<16xf32>
    %9 = vector.shape_cast %8 : vector<16xf32> to vector<16x1xf32>
    %cst_3 = arith.constant 3.100000e+01 : f32
    %10 = vector.broadcast %cst_3 : f32 to vector<16x1xf32>
    %11 = arith.divf %9, %10 : vector<16x1xf32>
    %c0_4 = arith.constant 0 : index
    %c0_5 = arith.constant 0 : index
    %12 = vector.load %arg2[%c0_4, %c0_5] : memref<1x32xf32, #tpu.memory_space<vmem>>, vector<1x32xf32>
    %13 = vector.broadcast %12 : vector<1x32xf32> to vector<16x32xf32>
    %14 = arith.mulf %13, %6 : vector<16x32xf32>
    %15 = math.sqrt %11 : vector<16x1xf32>
    %cst_6 = arith.constant 9.99999997E-7 : f32
    %16 = vector.broadcast %cst_6 : f32 to vector<16x1xf32>
    %17 = arith.addf %15, %16 : vector<16x1xf32>
    %18 = vector.broadcast %17 : vector<16x1xf32> to vector<16x32xf32>
    %19 = arith.divf %14, %18 : vector<16x32xf32>
    %c0_7 = arith.constant 0 : index
    %c0_8 = arith.constant 0 : index
    %20 = vector.load %arg3[%c0_7, %c0_8] : memref<1x32xf32, #tpu.memory_space<vmem>>, vector<1x32xf32>
    %21 = vector.broadcast %20 : vector<1x32xf32> to vector<16x32xf32>
    %22 = arith.addf %19, %21 : vector<16x32xf32>
    %23 = arith.truncf %22 : vector<16x32xf32> to vector<16x32xbf16>
    %c0_9 = arith.constant 0 : index
    %c0_10 = arith.constant 0 : index
    %24 = vector.load %arg4[%c0_9, %c0_10] : memref<32x96xbf16, #tpu.memory_space<vmem>>, vector<32x96xbf16>
    %cst_11 = arith.constant dense<0.000000e+00> : vector<16x96xf32>
    %25 = tpu.matmul %23, %24, %cst_11 {dimension_numbers = #tpu.dot_dimension_numbers<[1], [0], [0], [1], [0, 0, 1, 1], [], []>} : vector<16x32xbf16>, vector<32x96xbf16>, vector<16x96xf32> -> vector<16x96xf32>
    %c0_12 = arith.constant 0 : index
    %c0_13 = arith.constant 0 : index
    %26 = vector.load %arg5[%c0_12, %c0_13] : memref<1x96xf32, #tpu.memory_space<vmem>>, vector<1x96xf32>
    %27 = vector.broadcast %26 : vector<1x96xf32> to vector<16x96xf32>
    %28 = arith.addf %25, %27 : vector<16x96xf32>
    %29 = arith.truncf %28 : vector<16x96xf32> to vector<16x96xbf16>
    %c0_14 = arith.constant 0 : index
    %c0_15 = arith.constant 0 : index
    %30 = vector.load %arg6[%c0_14, %c0_15] : memref<16x96xbf16, #tpu.memory_space<vmem>>, vector<16x96xbf16>
    tpu.vector_store %arg6[%c0_14, %c0_15], %29 {strides = array<i32>} : memref<16x96xbf16, #tpu.memory_space<vmem>>, vector<16x96xbf16>,
    return
  }
  func.func @transform_0(%arg0: i32) -> (i32, i32) {
    %c0_i32 = arith.constant 0 : i32
    %c0_i32_0 = arith.constant 0 : i32
    return %arg0, %c0_i32 : i32, i32
  }
  func.func @transform_1(%arg0: i32) -> (i32, i32) {
    %c0_i32 = arith.constant 0 : i32
    %c0_i32_0 = arith.constant 0 : i32
    %c0_i32_1 = arith.constant 0 : i32
    return %c0_i32, %c0_i32_0 : i32, i32
  }
  func.func @transform_2(%arg0: i32) -> (i32, i32) {
    %c0_i32 = arith.constant 0 : i32
    %c0_i32_0 = arith.constant 0 : i32
    %c0_i32_1 = arith.constant 0 : i32
    return %c0_i32, %c0_i32_0 : i32, i32
  }
  func.func @transform_3(%arg0: i32) -> (i32, i32) {
    %c0_i32 = arith.constant 0 : i32
    %c0_i32_0 = arith.constant 0 : i32
    %c0_i32_1 = arith.constant 0 : i32
    return %c0_i32, %c0_i32_0 : i32, i32
  }
  func.func @transform_4(%arg0: i32) -> (i32, i32) {
    %c0_i32 = arith.constant 0 : i32
    %c0_i32_0 = arith.constant 0 : i32
    %c0_i32_1 = arith.constant 0 : i32
    return %c0_i32, %c0_i32_0 : i32, i32
  }
  func.func @transform_5(%arg0: i32) -> (i32, i32) {
    %c0_i32 = arith.constant 0 : i32
    %c0_i32_0 = arith.constant 0 : i32
    return %arg0, %c0_i32 : i32, i32
  }
}

module attributes {stable_mosaic.version = 11 : i64} {
  func.func @_attn_proj_res_kernel(%arg0: i32, %arg1: memref<1x4x8x8xbf16, #tpu.memory_space<vmem>>, %arg2: memref<1x4x8x8xbf16, #tpu.memory_space<vmem>>, %arg3: memref<1x4x8x8xbf16, #tpu.memory_space<vmem>>, %arg4: memref<1x8x8xi32, #tpu.memory_space<vmem>>, %arg5: memref<8x32xf32, #tpu.memory_space<vmem>>, %arg6: memref<4x8x32xbf16, #tpu.memory_space<vmem>>, %arg7: memref<1x32xf32, #tpu.memory_space<vmem>>, %arg8: memref<8x32xf32, #tpu.memory_space<vmem>>) attributes {dimension_semantics = [#tpu.dimension_semantics<parallel>], iteration_bounds = array<i64: 2>, scalar_prefetch = 0 : i64, scratch_operands = 0 : i64, tpu.core_type = #tpu.core_type<tc>, window_params = [{transform_indices = @transform_0, window_bounds = array<i64: 1, 4, 8, 8>}, {transform_indices = @transform_1, window_bounds = array<i64: 1, 4, 8, 8>}, {transform_indices = @transform_2, window_bounds = array<i64: 1, 4, 8, 8>}, {transform_indices = @transform_3, window_bounds = array<i64: 1, 8, 8>}, {transform_indices = @transform_4, window_bounds = array<i64: 8, 32>}, {pipeline_mode = #tpu.pipeline_mode<synchronous>, transform_indices = @transform_5, window_bounds = array<i64: 4, 8, 32>}, {pipeline_mode = #tpu.pipeline_mode<synchronous>, transform_indices = @transform_6, window_bounds = array<i64: 1, 32>}, {transform_indices = @transform_7, window_bounds = array<i64: 8, 32>}]} {
    %c0 = arith.constant 0 : index
    %c0_0 = arith.constant 0 : index
    %c0_1 = arith.constant 0 : index
    %c0_2 = arith.constant 0 : index
    %0 = vector.load %arg1[%c0, %c0_0, %c0_1, %c0_2] : memref<1x4x8x8xbf16, #tpu.memory_space<vmem>>, vector<1x4x8x8xbf16>
    %1 = vector.shape_cast %0 : vector<1x4x8x8xbf16> to vector<4x8x8xbf16>
    %c0_3 = arith.constant 0 : index
    %c0_4 = arith.constant 0 : index
    %c0_5 = arith.constant 0 : index
    %c0_6 = arith.constant 0 : index
    %2 = vector.load %arg2[%c0_3, %c0_4, %c0_5, %c0_6] : memref<1x4x8x8xbf16, #tpu.memory_space<vmem>>, vector<1x4x8x8xbf16>
    %3 = vector.shape_cast %2 : vector<1x4x8x8xbf16> to vector<4x8x8xbf16>
    %c0_7 = arith.constant 0 : index
    %c0_8 = arith.constant 0 : index
    %c0_9 = arith.constant 0 : index
    %c0_10 = arith.constant 0 : index
    %4 = vector.load %arg3[%c0_7, %c0_8, %c0_9, %c0_10] : memref<1x4x8x8xbf16, #tpu.memory_space<vmem>>, vector<1x4x8x8xbf16>
    %5 = vector.shape_cast %4 : vector<1x4x8x8xbf16> to vector<4x8x8xbf16>
    "tpu.trace_start"() <{level = 10 : i32, message = "hqd,hkd->hqk"}> : () -> ()
    %cst = arith.constant dense<0.000000e+00> : vector<4x8x8xf32>
    %6 = tpu.matmul %1, %3, %cst {dimension_numbers = #tpu.dot_dimension_numbers<[2], [2], [1], [1], [0, 0, 0, 1, 1, 1], [0], [0]>} : vector<4x8x8xbf16>, vector<4x8x8xbf16>, vector<4x8x8xf32> -> vector<4x8x8xf32>
    "tpu.trace_stop"() : () -> ()
    %c0_11 = arith.constant 0 : index
    %c0_12 = arith.constant 0 : index
    %c0_13 = arith.constant 0 : index
    %7 = vector.load %arg4[%c0_11, %c0_12, %c0_13] : memref<1x8x8xi32, #tpu.memory_space<vmem>>, vector<1x8x8xi32>
    %8 = vector.shape_cast %7 : vector<1x8x8xi32> to vector<8x8xi32>
    %9 = vector.shape_cast %8 : vector<8x8xi32> to vector<1x8x8xi32>
    %c0_i32 = arith.constant 0 : i32
    %10 = vector.broadcast %c0_i32 : i32 to vector<1x8x8xi32>
    %11 = arith.cmpi eq, %9, %10 : vector<1x8x8xi32>
    %cst_14 = arith.constant -1.000000e+20 : f32
    %12 = vector.shape_cast %11 : vector<1x8x8xi1> to vector<1x8x8xi1>
    %13 = vector.broadcast %12 : vector<1x8x8xi1> to vector<4x8x8xi1>
    %14 = vector.broadcast %cst_14 : f32 to vector<4x8x8xf32>
    %15 = arith.select %13, %14, %6 : vector<4x8x8xi1>, vector<4x8x8xf32>
    %cst_15 = arith.constant dense<0xFF800000> : vector<4x8xf32>
    %16 = vector.multi_reduction <maximumf>, %15, %cst_15 [2] : vector<4x8x8xf32> to vector<4x8xf32>
    %17 = vector.shape_cast %16 : vector<4x8xf32> to vector<4x8x1xf32>
    %18 = vector.broadcast %17 : vector<4x8x1xf32> to vector<4x8x8xf32>
    %19 = arith.subf %15, %18 : vector<4x8x8xf32>
    %20 = math.exp %19 : vector<4x8x8xf32>
    %cst_16 = arith.constant dense<0.000000e+00> : vector<4x8xf32>
    %21 = vector.multi_reduction <add>, %20, %cst_16 [2] : vector<4x8x8xf32> to vector<4x8xf32>
    %22 = vector.shape_cast %21 : vector<4x8xf32> to vector<4x8x1xf32>
    %23 = tpu.reciprocal %22 {approx = true} : vector<4x8x1xf32> -> vector<4x8x1xf32>
    %24 = vector.broadcast %23 : vector<4x8x1xf32> to vector<4x8x8xf32>
    %25 = arith.mulf %20, %24 : vector<4x8x8xf32>
    %26 = arith.truncf %25 : vector<4x8x8xf32> to vector<4x8x8xbf16>
    "tpu.trace_start"() <{level = 10 : i32, message = "hqk,hkd->hqd"}> : () -> ()
    %cst_17 = arith.constant dense<0.000000e+00> : vector<4x8x8xf32>
    %27 = tpu.matmul %26, %5, %cst_17 {dimension_numbers = #tpu.dot_dimension_numbers<[2], [1], [1], [2], [0, 0, 0, 1, 1, 2], [0], [0]>} : vector<4x8x8xbf16>, vector<4x8x8xbf16>, vector<4x8x8xf32> -> vector<4x8x8xf32>
    "tpu.trace_stop"() : () -> ()
    %c0_18 = arith.constant 0 : index
    %c0_19 = arith.constant 0 : index
    %28 = vector.load %arg5[%c0_18, %c0_19] : memref<8x32xf32, #tpu.memory_space<vmem>>, vector<8x32xf32>
    %c0_20 = arith.constant 0 : index
    %c0_21 = arith.constant 0 : index
    %29 = vector.load %arg7[%c0_20, %c0_21] : memref<1x32xf32, #tpu.memory_space<vmem>>, vector<1x32xf32>
    %30 = vector.broadcast %29 : vector<1x32xf32> to vector<8x32xf32>
    %31 = arith.addf %28, %30 : vector<8x32xf32>
    %32 = vector.extract_strided_slice %27 {offsets = [0, 0, 0], sizes = [1, 8, 8], strides = [1, 1, 1]} : vector<4x8x8xf32> to vector<1x8x8xf32>
    %33 = vector.shape_cast %32 : vector<1x8x8xf32> to vector<8x8xf32>
    %34 = arith.truncf %33 : vector<8x8xf32> to vector<8x8xbf16>
    %c0_22 = arith.constant 0 : index
    %c0_23 = arith.constant 0 : index
    %c0_24 = arith.constant 0 : index
    %35 = vector.load %arg6[%c0_22, %c0_23, %c0_24] : memref<4x8x32xbf16, #tpu.memory_space<vmem>>, vector<1x8x32xbf16>
    %36 = vector.shape_cast %35 : vector<1x8x32xbf16> to vector<8x32xbf16>
    %cst_25 = arith.constant dense<0.000000e+00> : vector<8x32xf32>
    %37 = tpu.matmul %34, %36, %cst_25 {dimension_numbers = #tpu.dot_dimension_numbers<[1], [0], [0], [1], [0, 0, 1, 1], [], []>} : vector<8x8xbf16>, vector<8x32xbf16>, vector<8x32xf32> -> vector<8x32xf32>
    %38 = arith.addf %31, %37 : vector<8x32xf32>
    %39 = vector.extract_strided_slice %27 {offsets = [1, 0, 0], sizes = [1, 8, 8], strides = [1, 1, 1]} : vector<4x8x8xf32> to vector<1x8x8xf32>
    %40 = vector.shape_cast %39 : vector<1x8x8xf32> to vector<8x8xf32>
    %41 = arith.truncf %40 : vector<8x8xf32> to vector<8x8xbf16>
    %c1 = arith.constant 1 : index
    %c0_26 = arith.constant 0 : index
    %c0_27 = arith.constant 0 : index
    %42 = vector.load %arg6[%c1, %c0_26, %c0_27] : memref<4x8x32xbf16, #tpu.memory_space<vmem>>, vector<1x8x32xbf16>
    %43 = vector.shape_cast %42 : vector<1x8x32xbf16> to vector<8x32xbf16>
    %cst_28 = arith.constant dense<0.000000e+00> : vector<8x32xf32>
    %44 = tpu.matmul %41, %43, %cst_28 {dimension_numbers = #tpu.dot_dimension_numbers<[1], [0], [0], [1], [0, 0, 1, 1], [], []>} : vector<8x8xbf16>, vector<8x32xbf16>, vector<8x32xf32> -> vector<8x32xf32>
    %45 = arith.addf %38, %44 : vector<8x32xf32>
    %46 = vector.extract_strided_slice %27 {offsets = [2, 0, 0], sizes = [1, 8, 8], strides = [1, 1, 1]} : vector<4x8x8xf32> to vector<1x8x8xf32>
    %47 = vector.shape_cast %46 : vector<1x8x8xf32> to vector<8x8xf32>
    %48 = arith.truncf %47 : vector<8x8xf32> to vector<8x8xbf16>
    %c2 = arith.constant 2 : index
    %c0_29 = arith.constant 0 : index
    %c0_30 = arith.constant 0 : index
    %49 = vector.load %arg6[%c2, %c0_29, %c0_30] : memref<4x8x32xbf16, #tpu.memory_space<vmem>>, vector<1x8x32xbf16>
    %50 = vector.shape_cast %49 : vector<1x8x32xbf16> to vector<8x32xbf16>
    %cst_31 = arith.constant dense<0.000000e+00> : vector<8x32xf32>
    %51 = tpu.matmul %48, %50, %cst_31 {dimension_numbers = #tpu.dot_dimension_numbers<[1], [0], [0], [1], [0, 0, 1, 1], [], []>} : vector<8x8xbf16>, vector<8x32xbf16>, vector<8x32xf32> -> vector<8x32xf32>
    %52 = arith.addf %45, %51 : vector<8x32xf32>
    %53 = vector.extract_strided_slice %27 {offsets = [3, 0, 0], sizes = [1, 8, 8], strides = [1, 1, 1]} : vector<4x8x8xf32> to vector<1x8x8xf32>
    %54 = vector.shape_cast %53 : vector<1x8x8xf32> to vector<8x8xf32>
    %55 = arith.truncf %54 : vector<8x8xf32> to vector<8x8xbf16>
    %c3 = arith.constant 3 : index
    %c0_32 = arith.constant 0 : index
    %c0_33 = arith.constant 0 : index
    %56 = vector.load %arg6[%c3, %c0_32, %c0_33] : memref<4x8x32xbf16, #tpu.memory_space<vmem>>, vector<1x8x32xbf16>
    %57 = vector.shape_cast %56 : vector<1x8x32xbf16> to vector<8x32xbf16>
    %cst_34 = arith.constant dense<0.000000e+00> : vector<8x32xf32>
    %58 = tpu.matmul %55, %57, %cst_34 {dimension_numbers = #tpu.dot_dimension_numbers<[1], [0], [0], [1], [0, 0, 1, 1], [], []>} : vector<8x8xbf16>, vector<8x32xbf16>, vector<8x32xf32> -> vector<8x32xf32>
    %59 = arith.addf %52, %58 : vector<8x32xf32>
    %c0_35 = arith.constant 0 : index
    %c0_36 = arith.constant 0 : index
    %60 = vector.load %arg8[%c0_35, %c0_36] : memref<8x32xf32, #tpu.memory_space<vmem>>, vector<8x32xf32>
    tpu.vector_store %arg8[%c0_35, %c0_36], %59 {strides = array<i32>} : memref<8x32xf32, #tpu.memory_space<vmem>>, vector<8x32xf32>,
    return
  }
  func.func @transform_0(%arg0: i32) -> (i32, i32, i32, i32) {
    %c0_i32 = arith.constant 0 : i32
    %c0_i32_0 = arith.constant 0 : i32
    %c0_i32_1 = arith.constant 0 : i32
    %c0_i32_2 = arith.constant 0 : i32
    return %arg0, %c0_i32, %c0_i32_0, %c0_i32_1 : i32, i32, i32, i32
  }
  func.func @transform_1(%arg0: i32) -> (i32, i32, i32, i32) {
    %c0_i32 = arith.constant 0 : i32
    %c0_i32_0 = arith.constant 0 : i32
    %c0_i32_1 = arith.constant 0 : i32
    %c0_i32_2 = arith.constant 0 : i32
    return %arg0, %c0_i32, %c0_i32_0, %c0_i32_1 : i32, i32, i32, i32
  }
  func.func @transform_2(%arg0: i32) -> (i32, i32, i32, i32) {
    %c0_i32 = arith.constant 0 : i32
    %c0_i32_0 = arith.constant 0 : i32
    %c0_i32_1 = arith.constant 0 : i32
    %c0_i32_2 = arith.constant 0 : i32
    return %arg0, %c0_i32, %c0_i32_0, %c0_i32_1 : i32, i32, i32, i32
  }
  func.func @transform_3(%arg0: i32) -> (i32, i32, i32) {
    %c0_i32 = arith.constant 0 : i32
    %c0_i32_0 = arith.constant 0 : i32
    %c0_i32_1 = arith.constant 0 : i32
    return %arg0, %c0_i32, %c0_i32_0 : i32, i32, i32
  }
  func.func @transform_4(%arg0: i32) -> (i32, i32) {
    %c0_i32 = arith.constant 0 : i32
    %c0_i32_0 = arith.constant 0 : i32
    return %arg0, %c0_i32 : i32, i32
  }
  func.func @transform_5(%arg0: i32) -> (i32, i32, i32) {
    %c0_i32 = arith.constant 0 : i32
    %c0_i32_0 = arith.constant 0 : i32
    %c0_i32_1 = arith.constant 0 : i32
    %c0_i32_2 = arith.constant 0 : i32
    return %c0_i32, %c0_i32_0, %c0_i32_1 : i32, i32, i32
  }
  func.func @transform_6(%arg0: i32) -> (i32, i32) {
    %c0_i32 = arith.constant 0 : i32
    %c0_i32_0 = arith.constant 0 : i32
    %c0_i32_1 = arith.constant 0 : i32
    return %c0_i32, %c0_i32_0 : i32, i32
  }
  func.func @transform_7(%arg0: i32) -> (i32, i32) {
    %c0_i32 = arith.constant 0 : i32
    %c0_i32_0 = arith.constant 0 : i32
    return %arg0, %c0_i32 : i32, i32
  }
}

module attributes {stable_mosaic.version = 11 : i64} {
  func.func @_ln_ffn_residual_kernel(%arg0: i32, %arg1: i32, %arg2: memref<16x32xf32, #tpu.memory_space<vmem>>, %arg3: memref<1x32xf32, #tpu.memory_space<vmem>>, %arg4: memref<1x32xf32, #tpu.memory_space<vmem>>, %arg5: memref<32x128xbf16, #tpu.memory_space<vmem>>, %arg6: memref<1x128xf32, #tpu.memory_space<vmem>>, %arg7: memref<128x32xbf16, #tpu.memory_space<vmem>>, %arg8: memref<1x32xf32, #tpu.memory_space<vmem>>, %arg9: memref<16x32xf32, #tpu.memory_space<vmem>>, %arg10: memref<16x32xbf16, #tpu.memory_space<vmem>>, %arg11: memref<16x32xf32, #tpu.memory_space<vmem>>) attributes {dimension_semantics = [#tpu.dimension_semantics<parallel>, #tpu.dimension_semantics<arbitrary>], iteration_bounds = array<i64: 1, 1>, scalar_prefetch = 0 : i64, scratch_operands = 2 : i64, tpu.core_type = #tpu.core_type<tc>, window_params = [{transform_indices = @transform_0, window_bounds = array<i64: 16, 32>}, {pipeline_mode = #tpu.pipeline_mode<synchronous>, transform_indices = @transform_1, window_bounds = array<i64: 1, 32>}, {pipeline_mode = #tpu.pipeline_mode<synchronous>, transform_indices = @transform_2, window_bounds = array<i64: 1, 32>}, {transform_indices = @transform_3, window_bounds = array<i64: 32, 128>}, {transform_indices = @transform_4, window_bounds = array<i64: 1, 128>}, {transform_indices = @transform_5, window_bounds = array<i64: 128, 32>}, {pipeline_mode = #tpu.pipeline_mode<synchronous>, transform_indices = @transform_6, window_bounds = array<i64: 1, 32>}, {transform_indices = @transform_7, window_bounds = array<i64: 16, 32>}]} {
    %c0_i32 = arith.constant 0 : i32
    %0 = arith.cmpi eq, %arg1, %c0_i32 : i32
    %1 = arith.extui %0 : i1 to i32
    %c0_i32_0 = arith.constant 0 : i32
    %2 = arith.cmpi ne, %1, %c0_i32_0 : i32
    scf.if %2 {
      %c0_16 = arith.constant 0 : index
      %c0_17 = arith.constant 0 : index
      %20 = vector.load %arg2[%c0_16, %c0_17] : memref<16x32xf32, #tpu.memory_space<vmem>>, vector<16x32xf32>
      %cst_18 = arith.constant dense<0.000000e+00> : vector<16xf32>
      %21 = vector.multi_reduction <add>, %20, %cst_18 [1] : vector<16x32xf32> to vector<16xf32>
      %22 = vector.shape_cast %21 : vector<16xf32> to vector<16x1xf32>
      %cst_19 = arith.constant 3.200000e+01 : f32
      %23 = vector.broadcast %cst_19 : f32 to vector<16x1xf32>
      %24 = arith.divf %22, %23 : vector<16x1xf32>
      %25 = vector.broadcast %24 : vector<16x1xf32> to vector<16x32xf32>
      %26 = arith.subf %20, %25 : vector<16x32xf32>
      %27 = arith.mulf %26, %26 : vector<16x32xf32>
      %cst_20 = arith.constant dense<0.000000e+00> : vector<16xf32>
      %28 = vector.multi_reduction <add>, %27, %cst_20 [1] : vector<16x32xf32> to vector<16xf32>
      %29 = vector.shape_cast %28 : vector<16xf32> to vector<16x1xf32>
      %cst_21 = arith.constant 3.100000e+01 : f32
      %30 = vector.broadcast %cst_21 : f32 to vector<16x1xf32>
      %31 = arith.divf %29, %30 : vector<16x1xf32>
      %c0_22 = arith.constant 0 : index
      %c0_23 = arith.constant 0 : index
      %32 = vector.load %arg3[%c0_22, %c0_23] : memref<1x32xf32, #tpu.memory_space<vmem>>, vector<1x32xf32>
      %33 = vector.broadcast %32 : vector<1x32xf32> to vector<16x32xf32>
      %34 = arith.mulf %33, %26 : vector<16x32xf32>
      %35 = math.sqrt %31 : vector<16x1xf32>
      %cst_24 = arith.constant 9.99999997E-7 : f32
      %36 = vector.broadcast %cst_24 : f32 to vector<16x1xf32>
      %37 = arith.addf %35, %36 : vector<16x1xf32>
      %38 = vector.broadcast %37 : vector<16x1xf32> to vector<16x32xf32>
      %39 = arith.divf %34, %38 : vector<16x32xf32>
      %c0_25 = arith.constant 0 : index
      %c0_26 = arith.constant 0 : index
      %40 = vector.load %arg4[%c0_25, %c0_26] : memref<1x32xf32, #tpu.memory_space<vmem>>, vector<1x32xf32>
      %41 = vector.broadcast %40 : vector<1x32xf32> to vector<16x32xf32>
      %42 = arith.addf %39, %41 : vector<16x32xf32>
      %43 = arith.truncf %42 : vector<16x32xf32> to vector<16x32xbf16>
      %c0_27 = arith.constant 0 : index
      %c0_28 = arith.constant 0 : index
      %44 = vector.load %arg10[%c0_27, %c0_28] : memref<16x32xbf16, #tpu.memory_space<vmem>>, vector<16x32xbf16>
      tpu.vector_store %arg10[%c0_27, %c0_28], %43 {strides = array<i32>} : memref<16x32xbf16, #tpu.memory_space<vmem>>, vector<16x32xbf16>,
      %cst_29 = arith.constant 0.000000e+00 : f32
      %45 = vector.broadcast %cst_29 : f32 to vector<16x32xf32>
      %c0_30 = arith.constant 0 : index
      %c0_31 = arith.constant 0 : index
      %46 = vector.load %arg11[%c0_30, %c0_31] : memref<16x32xf32, #tpu.memory_space<vmem>>, vector<16x32xf32>
      tpu.vector_store %arg11[%c0_30, %c0_31], %45 {strides = array<i32>} : memref<16x32xf32, #tpu.memory_space<vmem>>, vector<16x32xf32>,
    } else {
    }
    %c0 = arith.constant 0 : index
    %c0_1 = arith.constant 0 : index
    %3 = vector.load %arg10[%c0, %c0_1] : memref<16x32xbf16, #tpu.memory_space<vmem>>, vector<16x32xbf16>
    %c0_2 = arith.constant 0 : index
    %c0_3 = arith.constant 0 : index
    %4 = vector.load %arg5[%c0_2, %c0_3] : memref<32x128xbf16, #tpu.memory_space<vmem>>, vector<32x128xbf16>
    %cst = arith.constant dense<0.000000e+00> : vector<16x128xf32>
    %5 = tpu.matmul %3, %4, %cst {dimension_numbers = #tpu.dot_dimension_numbers<[1], [0], [0], [1], [0, 0, 1, 1], [], []>} : vector<16x32xbf16>, vector<32x128xbf16>, vector<16x128xf32> -> vector<16x128xf32>
    %c0_4 = arith.constant 0 : index
    %c0_5 = arith.constant 0 : index
    %6 = vector.load %arg6[%c0_4, %c0_5] : memref<1x128xf32, #tpu.memory_space<vmem>>, vector<1x128xf32>
    %7 = vector.broadcast %6 : vector<1x128xf32> to vector<16x128xf32>
    %8 = arith.addf %5, %7 : vector<16x128xf32>
    %cst_6 = arith.constant 0.000000e+00 : f32
    %9 = vector.broadcast %cst_6 : f32 to vector<16x128xf32>
    %10 = arith.maximumf %8, %9 : vector<16x128xf32>
    %c0_7 = arith.constant 0 : index
    %c0_8 = arith.constant 0 : index
    %11 = vector.load %arg11[%c0_7, %c0_8] : memref<16x32xf32, #tpu.memory_space<vmem>>, vector<16x32xf32>
    %12 = arith.truncf %10 : vector<16x128xf32> to vector<16x128xbf16>
    %c0_9 = arith.constant 0 : index
    %c0_10 = arith.constant 0 : index
    %13 = vector.load %arg7[%c0_9, %c0_10] : memref<128x32xbf16, #tpu.memory_space<vmem>>, vector<128x32xbf16>
    %cst_11 = arith.constant dense<0.000000e+00> : vector<16x32xf32>
    %14 = tpu.matmul %12, %13, %cst_11 {dimension_numbers = #tpu.dot_dimension_numbers<[1], [0], [0], [1], [0, 0, 1, 1], [], []>} : vector<16x128xbf16>, vector<128x32xbf16>, vector<16x32xf32> -> vector<16x32xf32>
    %15 = arith.addf %11, %14 : vector<16x32xf32>
    %c0_12 = arith.constant 0 : index
    %c0_13 = arith.constant 0 : index
    %16 = vector.load %arg11[%c0_12, %c0_13] : memref<16x32xf32, #tpu.memory_space<vmem>>, vector<16x32xf32>
    tpu.vector_store %arg11[%c0_12, %c0_13], %15 {strides = array<i32>} : memref<16x32xf32, #tpu.memory_space<vmem>>, vector<16x32xf32>,
    %c0_i32_14 = arith.constant 0 : i32
    %17 = arith.cmpi eq, %arg1, %c0_i32_14 : i32
    %18 = arith.extui %17 : i1 to i32
    %c0_i32_15 = arith.constant 0 : i32
    %19 = arith.cmpi ne, %18, %c0_i32_15 : i32
    scf.if %19 {
      %c0_16 = arith.constant 0 : index
      %c0_17 = arith.constant 0 : index
      %20 = vector.load %arg2[%c0_16, %c0_17] : memref<16x32xf32, #tpu.memory_space<vmem>>, vector<16x32xf32>
      %c0_18 = arith.constant 0 : index
      %c0_19 = arith.constant 0 : index
      %21 = vector.load %arg11[%c0_18, %c0_19] : memref<16x32xf32, #tpu.memory_space<vmem>>, vector<16x32xf32>
      %22 = arith.addf %20, %21 : vector<16x32xf32>
      %c0_20 = arith.constant 0 : index
      %c0_21 = arith.constant 0 : index
      %23 = vector.load %arg8[%c0_20, %c0_21] : memref<1x32xf32, #tpu.memory_space<vmem>>, vector<1x32xf32>
      %24 = vector.broadcast %23 : vector<1x32xf32> to vector<16x32xf32>
      %25 = arith.addf %22, %24 : vector<16x32xf32>
      %c0_22 = arith.constant 0 : index
      %c0_23 = arith.constant 0 : index
      %26 = vector.load %arg9[%c0_22, %c0_23] : memref<16x32xf32, #tpu.memory_space<vmem>>, vector<16x32xf32>
      tpu.vector_store %arg9[%c0_22, %c0_23], %25 {strides = array<i32>} : memref<16x32xf32, #tpu.memory_space<vmem>>, vector<16x32xf32>,
    } else {
    }
    return
  }
  func.func @transform_0(%arg0: i32, %arg1: i32) -> (i32, i32) {
    %c0_i32 = arith.constant 0 : i32
    %c0_i32_0 = arith.constant 0 : i32
    return %arg0, %c0_i32 : i32, i32
  }
  func.func @transform_1(%arg0: i32, %arg1: i32) -> (i32, i32) {
    %c0_i32 = arith.constant 0 : i32
    %c0_i32_0 = arith.constant 0 : i32
    %c0_i32_1 = arith.constant 0 : i32
    return %c0_i32, %c0_i32_0 : i32, i32
  }
  func.func @transform_2(%arg0: i32, %arg1: i32) -> (i32, i32) {
    %c0_i32 = arith.constant 0 : i32
    %c0_i32_0 = arith.constant 0 : i32
    %c0_i32_1 = arith.constant 0 : i32
    return %c0_i32, %c0_i32_0 : i32, i32
  }
  func.func @transform_3(%arg0: i32, %arg1: i32) -> (i32, i32) {
    %c0_i32 = arith.constant 0 : i32
    %c0_i32_0 = arith.constant 0 : i32
    return %c0_i32, %arg1 : i32, i32
  }
  func.func @transform_4(%arg0: i32, %arg1: i32) -> (i32, i32) {
    %c0_i32 = arith.constant 0 : i32
    %c0_i32_0 = arith.constant 0 : i32
    return %c0_i32, %arg1 : i32, i32
  }
  func.func @transform_5(%arg0: i32, %arg1: i32) -> (i32, i32) {
    %c0_i32 = arith.constant 0 : i32
    %c0_i32_0 = arith.constant 0 : i32
    return %arg1, %c0_i32 : i32, i32
  }
  func.func @transform_6(%arg0: i32, %arg1: i32) -> (i32, i32) {
    %c0_i32 = arith.constant 0 : i32
    %c0_i32_0 = arith.constant 0 : i32
    %c0_i32_1 = arith.constant 0 : i32
    return %c0_i32, %c0_i32_0 : i32, i32
  }
  func.func @transform_7(%arg0: i32, %arg1: i32) -> (i32, i32) {
    %c0_i32 = arith.constant 0 : i32
    %c0_i32_0 = arith.constant 0 : i32
    return %arg0, %c0_i32 : i32, i32
  }
}

module attributes {stable_mosaic.version = 11 : i64} {
  func.func @_final_head_kernel(%arg0: i32, %arg1: i32, %arg2: memref<16x32xf32, #tpu.memory_space<vmem>>, %arg3: memref<1x32xf32, #tpu.memory_space<vmem>>, %arg4: memref<1x32xf32, #tpu.memory_space<vmem>>, %arg5: memref<32x32xbf16, #tpu.memory_space<vmem>>, %arg6: memref<1x32xf32, #tpu.memory_space<vmem>>, %arg7: memref<32x64xbf16, #tpu.memory_space<vmem>>, %arg8: memref<1x64xf32, #tpu.memory_space<vmem>>, %arg9: memref<16x64xf32, #tpu.memory_space<vmem>>, %arg10: memref<16x32xf32, #tpu.memory_space<vmem>>, %arg11: memref<16x32xbf16, #tpu.memory_space<vmem>>) attributes {dimension_semantics = [#tpu.dimension_semantics<parallel>, #tpu.dimension_semantics<arbitrary>], iteration_bounds = array<i64: 1, 1>, scalar_prefetch = 0 : i64, scratch_operands = 1 : i64, tpu.core_type = #tpu.core_type<tc>, window_params = [{transform_indices = @transform_0, window_bounds = array<i64: 16, 32>}, {pipeline_mode = #tpu.pipeline_mode<synchronous>, transform_indices = @transform_1, window_bounds = array<i64: 1, 32>}, {pipeline_mode = #tpu.pipeline_mode<synchronous>, transform_indices = @transform_2, window_bounds = array<i64: 1, 32>}, {pipeline_mode = #tpu.pipeline_mode<synchronous>, transform_indices = @transform_3, window_bounds = array<i64: 32, 32>}, {pipeline_mode = #tpu.pipeline_mode<synchronous>, transform_indices = @transform_4, window_bounds = array<i64: 1, 32>}, {transform_indices = @transform_5, window_bounds = array<i64: 32, 64>}, {transform_indices = @transform_6, window_bounds = array<i64: 1, 64>}, {transform_indices = @transform_7, window_bounds = array<i64: 16, 64>}, {transform_indices = @transform_8, window_bounds = array<i64: 16, 32>}]} {
    %c0_i32 = arith.constant 0 : i32
    %0 = arith.cmpi eq, %arg1, %c0_i32 : i32
    %1 = arith.extui %0 : i1 to i32
    %c0_i32_0 = arith.constant 0 : i32
    %2 = arith.cmpi ne, %1, %c0_i32_0 : i32
    scf.if %2 {
      %c0_8 = arith.constant 0 : index
      %c0_9 = arith.constant 0 : index
      %10 = vector.load %arg2[%c0_8, %c0_9] : memref<16x32xf32, #tpu.memory_space<vmem>>, vector<16x32xf32>
      %cst_10 = arith.constant dense<0.000000e+00> : vector<16xf32>
      %11 = vector.multi_reduction <add>, %10, %cst_10 [1] : vector<16x32xf32> to vector<16xf32>
      %12 = vector.shape_cast %11 : vector<16xf32> to vector<16x1xf32>
      %cst_11 = arith.constant 3.200000e+01 : f32
      %13 = vector.broadcast %cst_11 : f32 to vector<16x1xf32>
      %14 = arith.divf %12, %13 : vector<16x1xf32>
      %15 = vector.broadcast %14 : vector<16x1xf32> to vector<16x32xf32>
      %16 = arith.subf %10, %15 : vector<16x32xf32>
      %17 = arith.mulf %16, %16 : vector<16x32xf32>
      %cst_12 = arith.constant dense<0.000000e+00> : vector<16xf32>
      %18 = vector.multi_reduction <add>, %17, %cst_12 [1] : vector<16x32xf32> to vector<16xf32>
      %19 = vector.shape_cast %18 : vector<16xf32> to vector<16x1xf32>
      %cst_13 = arith.constant 3.200000e+01 : f32
      %20 = vector.broadcast %cst_13 : f32 to vector<16x1xf32>
      %21 = arith.divf %19, %20 : vector<16x1xf32>
      %cst_14 = arith.constant 9.99999974E-6 : f32
      %22 = vector.broadcast %cst_14 : f32 to vector<16x1xf32>
      %23 = arith.addf %21, %22 : vector<16x1xf32>
      %24 = math.rsqrt %23 : vector<16x1xf32>
      %25 = vector.broadcast %24 : vector<16x1xf32> to vector<16x32xf32>
      %26 = arith.mulf %16, %25 : vector<16x32xf32>
      %c0_15 = arith.constant 0 : index
      %c0_16 = arith.constant 0 : index
      %27 = vector.load %arg3[%c0_15, %c0_16] : memref<1x32xf32, #tpu.memory_space<vmem>>, vector<1x32xf32>
      %28 = vector.broadcast %27 : vector<1x32xf32> to vector<16x32xf32>
      %29 = arith.mulf %26, %28 : vector<16x32xf32>
      %c0_17 = arith.constant 0 : index
      %c0_18 = arith.constant 0 : index
      %30 = vector.load %arg4[%c0_17, %c0_18] : memref<1x32xf32, #tpu.memory_space<vmem>>, vector<1x32xf32>
      %31 = vector.broadcast %30 : vector<1x32xf32> to vector<16x32xf32>
      %32 = arith.addf %29, %31 : vector<16x32xf32>
      %c0_19 = arith.constant 0 : index
      %c0_20 = arith.constant 0 : index
      %33 = vector.load %arg10[%c0_19, %c0_20] : memref<16x32xf32, #tpu.memory_space<vmem>>, vector<16x32xf32>
      tpu.vector_store %arg10[%c0_19, %c0_20], %32 {strides = array<i32>} : memref<16x32xf32, #tpu.memory_space<vmem>>, vector<16x32xf32>,
      %34 = arith.truncf %32 : vector<16x32xf32> to vector<16x32xbf16>
      %c0_21 = arith.constant 0 : index
      %c0_22 = arith.constant 0 : index
      %35 = vector.load %arg5[%c0_21, %c0_22] : memref<32x32xbf16, #tpu.memory_space<vmem>>, vector<32x32xbf16>
      %cst_23 = arith.constant dense<0.000000e+00> : vector<16x32xf32>
      %36 = tpu.matmul %34, %35, %cst_23 {dimension_numbers = #tpu.dot_dimension_numbers<[1], [0], [0], [1], [0, 0, 1, 1], [], []>} : vector<16x32xbf16>, vector<32x32xbf16>, vector<16x32xf32> -> vector<16x32xf32>
      %c0_24 = arith.constant 0 : index
      %c0_25 = arith.constant 0 : index
      %37 = vector.load %arg6[%c0_24, %c0_25] : memref<1x32xf32, #tpu.memory_space<vmem>>, vector<1x32xf32>
      %38 = vector.broadcast %37 : vector<1x32xf32> to vector<16x32xf32>
      %39 = arith.addf %36, %38 : vector<16x32xf32>
      %40 = arith.truncf %39 : vector<16x32xf32> to vector<16x32xbf16>
      %c0_26 = arith.constant 0 : index
      %c0_27 = arith.constant 0 : index
      %41 = vector.load %arg11[%c0_26, %c0_27] : memref<16x32xbf16, #tpu.memory_space<vmem>>, vector<16x32xbf16>
      tpu.vector_store %arg11[%c0_26, %c0_27], %40 {strides = array<i32>} : memref<16x32xbf16, #tpu.memory_space<vmem>>, vector<16x32xbf16>,
    } else {
    }
    %c0 = arith.constant 0 : index
    %c0_1 = arith.constant 0 : index
    %3 = vector.load %arg11[%c0, %c0_1] : memref<16x32xbf16, #tpu.memory_space<vmem>>, vector<16x32xbf16>
    %c0_2 = arith.constant 0 : index
    %c0_3 = arith.constant 0 : index
    %4 = vector.load %arg7[%c0_2, %c0_3] : memref<32x64xbf16, #tpu.memory_space<vmem>>, vector<32x64xbf16>
    %cst = arith.constant dense<0.000000e+00> : vector<16x64xf32>
    %5 = tpu.matmul %3, %4, %cst {dimension_numbers = #tpu.dot_dimension_numbers<[1], [0], [0], [1], [0, 0, 1, 1], [], []>} : vector<16x32xbf16>, vector<32x64xbf16>, vector<16x64xf32> -> vector<16x64xf32>
    %c0_4 = arith.constant 0 : index
    %c0_5 = arith.constant 0 : index
    %6 = vector.load %arg8[%c0_4, %c0_5] : memref<1x64xf32, #tpu.memory_space<vmem>>, vector<1x64xf32>
    %7 = vector.broadcast %6 : vector<1x64xf32> to vector<16x64xf32>
    %8 = arith.addf %5, %7 : vector<16x64xf32>
    %c0_6 = arith.constant 0 : index
    %c0_7 = arith.constant 0 : index
    %9 = vector.load %arg9[%c0_6, %c0_7] : memref<16x64xf32, #tpu.memory_space<vmem>>, vector<16x64xf32>
    tpu.vector_store %arg9[%c0_6, %c0_7], %8 {strides = array<i32>} : memref<16x64xf32, #tpu.memory_space<vmem>>, vector<16x64xf32>,
    return
  }
  func.func @transform_0(%arg0: i32, %arg1: i32) -> (i32, i32) {
    %c0_i32 = arith.constant 0 : i32
    %c0_i32_0 = arith.constant 0 : i32
    return %arg0, %c0_i32 : i32, i32
  }
  func.func @transform_1(%arg0: i32, %arg1: i32) -> (i32, i32) {
    %c0_i32 = arith.constant 0 : i32
    %c0_i32_0 = arith.constant 0 : i32
    %c0_i32_1 = arith.constant 0 : i32
    return %c0_i32, %c0_i32_0 : i32, i32
  }
  func.func @transform_2(%arg0: i32, %arg1: i32) -> (i32, i32) {
    %c0_i32 = arith.constant 0 : i32
    %c0_i32_0 = arith.constant 0 : i32
    %c0_i32_1 = arith.constant 0 : i32
    return %c0_i32, %c0_i32_0 : i32, i32
  }
  func.func @transform_3(%arg0: i32, %arg1: i32) -> (i32, i32) {
    %c0_i32 = arith.constant 0 : i32
    %c0_i32_0 = arith.constant 0 : i32
    %c0_i32_1 = arith.constant 0 : i32
    return %c0_i32, %c0_i32_0 : i32, i32
  }
  func.func @transform_4(%arg0: i32, %arg1: i32) -> (i32, i32) {
    %c0_i32 = arith.constant 0 : i32
    %c0_i32_0 = arith.constant 0 : i32
    %c0_i32_1 = arith.constant 0 : i32
    return %c0_i32, %c0_i32_0 : i32, i32
  }
  func.func @transform_5(%arg0: i32, %arg1: i32) -> (i32, i32) {
    %c0_i32 = arith.constant 0 : i32
    %c0_i32_0 = arith.constant 0 : i32
    return %c0_i32, %arg1 : i32, i32
  }
  func.func @transform_6(%arg0: i32, %arg1: i32) -> (i32, i32) {
    %c0_i32 = arith.constant 0 : i32
    %c0_i32_0 = arith.constant 0 : i32
    return %c0_i32, %arg1 : i32, i32
  }
  func.func @transform_7(%arg0: i32, %arg1: i32) -> (i32, i32) {
    %c0_i32 = arith.constant 0 : i32
    return %arg0, %arg1 : i32, i32
  }
  func.func @transform_8(%arg0: i32, %arg1: i32) -> (i32, i32) {
    %c0_i32 = arith.constant 0 : i32
    %c0_i32_0 = arith.constant 0 : i32
    return %arg0, %c0_i32 : i32, i32
  }
}

</mosaic_0001>

<llo_original>
// kernel: transformer_lm_forward.7
$region0: #{transformer_lm_forward.7}
  #allocation0 [shape = 'u32[]', space=smem, size = 0x4, offset = 0x4, fixed_abs, tag = 'smem constant byte address 0x4 - core index']
  #allocation1 [shape = 'u32[144,128]{1,0:T(1,128)}', space=vmem, size = 0x12000, scoped, tag = 'internal scratch']
  %s0 = inlined_call_operand.vmem [shape: f32[16,32], index: 0, kind: input, shape index: {}]
  %s1 = inlined_call_operand.vmem [shape: f32[1,32], index: 1, kind: input, shape index: {}]
  %s2 = inlined_call_operand.vmem [shape: f32[1,32], index: 2, kind: input, shape index: {}]
  %s3 = inlined_call_operand.vmem [shape: bf16[32,96], index: 3, kind: input, shape index: {}]
  %s4 = inlined_call_operand.vmem [shape: f32[1,96], index: 4, kind: input, shape index: {}]
  %s5 = inlined_call_operand.vmem [shape: bf16[16,96], index: 5, kind: output, shape index: {}]
  %s6 = sld [smem:[#allocation0]]
  $region30: #{transformer_lm_forward.7} parent=0
    _
  %s8 = ssub.s32 1, %s6
  %s9 = scalar_select 0, %s8, %s6
  // Predicated region
  $region2: #{transformer_lm_forward.7} parent=0 // pred_check
    _
  $region3: #{transformer_lm_forward.7} parent=0 // pred_check_branch
    %11 = sbr.rel (0) target = $region5
  $region4: #{transformer_lm_forward.7} parent=0 // pred_region
    _
  $region5: #{transformer_lm_forward.7} parent=0 // pred_fallthru
    _
  // Predicated region
  $region6: #{transformer_lm_forward.7} parent=0 // pred_check
    _
  $region7: #{transformer_lm_forward.7} parent=0 // pred_check_branch
    %13 = sbr.rel (0) target = $region9
  $region8: #{transformer_lm_forward.7} parent=0 // pred_region
    _
  $region9: #{transformer_lm_forward.7} parent=0 // pred_fallthru
    _
  // Predicated region
  $region10: #{transformer_lm_forward.7} parent=0 // pred_check
    _
  $region11: #{transformer_lm_forward.7} parent=0 // pred_check_branch
    %15 = sbr.rel (0) target = $region13
  $region12: #{transformer_lm_forward.7} parent=0 // pred_region
    _
  $region13: #{transformer_lm_forward.7} parent=0 // pred_fallthru
    _
  // Predicated region
  $region14: #{transformer_lm_forward.7} parent=0 // pred_check
    _
  $region15: #{transformer_lm_forward.7} parent=0 // pred_check_branch
    %17 = sbr.rel (0) target = $region17
  $region16: #{transformer_lm_forward.7} parent=0 // pred_region
    _
  $region17: #{transformer_lm_forward.7} parent=0 // pred_fallthru
    _
  // Predicated region
  $region18: #{transformer_lm_forward.7} parent=0 // pred_check
    _
  $region19: #{transformer_lm_forward.7} parent=0 // pred_check_branch
    %19 = sbr.rel (0) target = $region21
  $region20: #{transformer_lm_forward.7} parent=0 // pred_region
    _
  $region21: #{transformer_lm_forward.7} parent=0 // pred_fallthru
    _
  %v21 = vld [vmem:[%s0] sm:$0xff]
  %v22 = vld [vmem:[%s0 + $0x8] sm:$0xff]
  %vm23 = vcmask 261120
  %v24 = vsel %vm23, %v21, 0.0
  %25 = vadd.xlane.f32.xlu0 %v24
  %v26 = vpop.xlane.xlu0 %25
  %v27 = vsel %vm23, %v22, 0.0
  %28 = vadd.xlane.f32.xlu0 %v27
  %v29 = vpop.xlane.xlu0 %28
  %v30 = vrcp.pop 32.0
  %v31 = vmul.f32 %v26, %v30
  %v32 = vmul.f32 %v29, %v30
  %v33 = vsub.f32 %v21, %v31
  %v34 = vsub.f32 %v22, %v32
  %v35 = vmul.f32 %v33, %v33
  %v36 = vmul.f32 %v34, %v34
  %v37 = vsel %vm23, %v35, 0.0
  %38 = vadd.xlane.f32.xlu0 %v37
  %v39 = vpop.xlane.xlu0 %38
  %v40 = vsel %vm23, %v36, 0.0
  %41 = vadd.xlane.f32.xlu0 %v40
  %v42 = vpop.xlane.xlu0 %41
  %v43 = vrcp.pop 31.0
  %v44 = vmul.f32 %v39, %v43
  %v45 = vmul.f32 %v42, %v43
  %v46 = vld [vmem:[%s1] sm:$0x1]
  %v48 = vlaneseq
  %v49 = vshrl.u32 %v48, 7
  %v50 = vsub.s32 0, %v49
  %v51 = vrot.slane %v46, %v50
  %v53 = vmul.f32 %v51, %v33
  %v54 = vmul.f32 %v51, %v34
  %v55 = vrsqrt.pop %v44
  %v56 = vmul.f32 %v44, %v55
  %vm57 = vcmp.eq.f32.partialorder %v44, inf
  %v58 = vsel %vm57, %v44, %v56
  %vm59 = vcmp.eq.f32.partialorder %v44, 0.0
  %v60 = vand.u32 %v44, 2147483648
  %v61 = vsel %vm59, %v60, %v58
  %v62 = vrsqrt.pop %v45
  %v63 = vmul.f32 %v45, %v62
  %vm64 = vcmp.eq.f32.partialorder %v45, inf
  %v65 = vsel %vm64, %v45, %v63
  %vm66 = vcmp.eq.f32.partialorder %v45, 0.0
  %v67 = vand.u32 %v45, 2147483648
  %v68 = vsel %vm66, %v67, %v65
  %v69 = vadd.f32 %v61, 1e-06
  %v70 = vadd.f32 %v68, 1e-06
  %v71 = vrcp.pop %v69
  %v72 = vmul.f32 %v53, %v71
  %v73 = vrcp.pop %v70
  %v74 = vmul.f32 %v54, %v73
  %v75 = vld [vmem:[%s2] sm:$0x1]
  %v77 = vlaneseq
  %v78 = vshrl.u32 %v77, 7
  %v79 = vsub.s32 0, %v78
  %v80 = vrot.slane %v75, %v79
  %v82 = vadd.f32 %v72, %v80
  %v83 = vadd.f32 %v74, %v80
  %v84 = vpack.c.bf16 %v83, %v82
  %v85 = vld [vmem:[%s3] sm:$0xf]
  %v86 = vld [vmem:[%s3 + $0x4] sm:$0xf]
  %v87 = vld [vmem:[%s3 + $0x8] sm:$0xf]
  %v88 = vld [vmem:[%s3 + $0xc] sm:$0xf]
  %v89 = vld [vmem:[%s4] sm:$0x1]
  %v91 = vlaneseq
  %v92 = vshrl.u32 %v91, 7
  %v93 = vsub.s32 0, %v92
  %v94 = vrot.slane %v89, %v93
  %v100 = vunpack.c.l.b16 %v85
  %v101 = vunpack.c.l.b16 %v86
  %v102 = vunpack.c.l.b16 %v87
  %v103 = vunpack.c.l.b16 %v88
  %v104 = vpack.c.b16 %v101, %v100
  %v105 = vpack.c.b16 %v103, %v102
  %v109 = vsel %vm23, %v84, 0
  %111 = vmatprep.subr.bf16.mxu0 0
  %112 = vmatpush1.bf16.msra.mxu0 %v104
  %113 = vmatprep.subr.bf16.mxu0 0
  %114 = vmatpush1.bf16.msra.mxu0 %v105
  %115 = vmatprep.subr.bf16.mxu0 0
  %116 = vmatpush1.bf16.msra.mxu0 0
  %117 = vmatprep.subr.bf16.mxu0 0
  %118 = vmatpush1.bf16.msra.mxu0 0
  %119 = vmatprep.subr.bf16.mxu0 0
  %120 = vmatpush1.bf16.msra.mxu0 0
  %121 = vmatprep.subr.bf16.mxu0 0
  %122 = vmatpush1.bf16.msra.mxu0 0
  %123 = vmatprep.subr.bf16.mxu0 0
  %124 = vmatpush1.bf16.msra.mxu0 0
  %125 = vmatprep.subr.bf16.mxu0 0
  %126 = vmatpush1.bf16.msra.mxu0 0
  %127 = vmatprep.subr.bf16.mxu0 0
  %128 = vmatpush1.bf16.msra.mxu0 0
  %129 = vmatprep.subr.bf16.mxu0 0
  %130 = vmatpush1.bf16.msra.mxu0 0
  %131 = vmatprep.subr.bf16.mxu0 0
  %132 = vmatpush1.bf16.msra.mxu0 0
  %133 = vmatprep.subr.bf16.mxu0 0
  %134 = vmatpush1.bf16.msra.mxu0 0
  %135 = vmatprep.subr.bf16.mxu0 0
  %136 = vmatpush1.bf16.msra.mxu0 0
  %137 = vmatprep.subr.bf16.mxu0 0
  %138 = vmatpush1.bf16.msra.mxu0 0
  %139 = vmatprep.subr.bf16.mxu0 0
  %140 = vmatpush1.bf16.msra.mxu0 0
  %141 = vmatprep.subr.bf16.mxu0 0
  %142 = vmatpush1.bf16.msra.mxu0 0
  %143 = vmatprep.mubr.bf16.mxu0 0
  %144 = vmatmul.mubr.bf16.gmra.mrb[0].mxu0 %v109
  %v145 = vpop.f32.mrb[0].mxu0
  %v146 = vadd.f32 %v94, %v145
  %v147 = vpop.f32.mrb[0].mxu0
  %v148 = vpop.f32.mrb[0].mxu0
  %v149 = vadd.f32 %v94, %v148
  %v150 = vpop.f32.mrb[0].mxu0
  %151 = vdwg.mxu0
  %v152 = vpack.c.bf16 %v149, %v146
  %v154 = vunpack.c.l.b16 %v152
  %v155 = vunpack.c.h.b16 %v152
  %v156 = vpack.c.b16 %v154, %v154
  %v157 = vpack.c.b16 %v155, %v155
  %vm160 = vcmask 781312
  %161 = vst.msk [vmem:[%s5] sm:$0xf] %vm160, %v156
  %162 = vst.msk [vmem:[%s5 + $0x4] sm:$0xf] %vm160, %v157
  // Predicated region
  $region22: #{transformer_lm_forward.7} parent=0 // pred_check
    _
  $region23: #{transformer_lm_forward.7} parent=0 // pred_check_branch
    %164 = sbr.rel (0) target = $region25
  $region24: #{transformer_lm_forward.7} parent=0 // pred_region
    _
  $region25: #{transformer_lm_forward.7} parent=0 // pred_fallthru
    _
  // Predicated region
  $region26: #{transformer_lm_forward.7} parent=0 // pred_check
    _
  $region27: #{transformer_lm_forward.7} parent=0 // pred_check_branch
    %166 = sbr.rel (0) target = $region29
  $region28: #{transformer_lm_forward.7} parent=0 // pred_region
    _
  $region29: #{transformer_lm_forward.7} parent=0 // pred_fallthru
    _

// kernel: transformer_lm_forward.8
$region0: #{transformer_lm_forward.8}
  #allocation0 [shape = 'u32[]', space=smem, size = 0x4, offset = 0x4, fixed_abs, tag = 'smem constant byte address 0x4 - core index']
  #allocation1 [shape = 'u32[144,128]{1,0:T(1,128)}', space=vmem, size = 0x12000, scoped, tag = 'internal scratch']
  %s0 = inlined_call_operand.vmem [shape: bf16[2,4,8,8], index: 0, kind: input, shape index: {}]
  %s1 = inlined_call_operand.vmem [shape: bf16[2,4,8,8], index: 1, kind: input, shape index: {}]
  %s2 = inlined_call_operand.vmem [shape: bf16[2,4,8,8], index: 2, kind: input, shape index: {}]
  %s3 = inlined_call_operand.vmem [shape: s32[2,8,8], index: 3, kind: input, shape index: {}]
  %s4 = inlined_call_operand.vmem [shape: f32[16,32], index: 4, kind: input, shape index: {}]
  %s5 = inlined_call_operand.vmem [shape: bf16[4,8,32], index: 5, kind: input, shape index: {}]
  %s6 = inlined_call_operand.vmem [shape: f32[1,32], index: 6, kind: input, shape index: {}]
  %s7 = inlined_call_operand.vmem [shape: f32[16,32], index: 7, kind: output, shape index: {}]
  %s8 = sld [smem:[#allocation0]]
  $region61: #{transformer_lm_forward.8} parent=0
    _
  %s10 = ssub.s32 1, %s8
  %s11 = scalar_select 0, %s10, %s8
  loop: start=0, step=1, limit=4
  $region2: #{transformer_lm_forward.8} parent=0 // loop_pre_header
    _
  $region3: #{transformer_lm_forward.8} parent=0 // loop_header
    %s13 = sphi 0, %s17
    %p14 = scmp.ge.s32.totalorder %s13, 4
    %s23 = sphi 0, %s25
    %s26 = sphi 0, %s23
    %s27 = sphi 0, %s26
    %s43 = sphi 0, %s27
    %s49 = sphi 0, %s51
    %s52 = sphi 0, %s49
    %s53 = sphi 0, %s52
    %s69 = sphi 0, %s53
    %s75 = sphi 0, %s77
    %s78 = sphi 0, %s75
    %s79 = sphi 0, %s78
    %s95 = sphi 0, %s79
    %s101 = sphi 0, %s103
    %s104 = sphi 0, %s101
    %s105 = sphi 0, %s104
    %s121 = sphi 0, %s105
    %s127 = sphi 0, %s129
    %s130 = sphi 0, %s127
    %s131 = sphi 0, %s130
    %s147 = sphi 0, %s131
    %s151 = sphi 0, %s151
    %s153 = sphi 0, %s151
    %s154 = sphi 0, %s153
    %s168 = sphi 0, %s154
    %s172 = sphi 0, %s172
    %s174 = sphi 0, %s172
    %s175 = sphi 0, %s174
    %s189 = sphi 0, %s175
    %s195 = sphi 0, %s197
    %s198 = sphi 0, %s195
    %s199 = sphi 0, %s198
    %s215 = sphi 0, %s199
  $region4: #{transformer_lm_forward.8} parent=0 // loop_header_branch
    %16 = sbr.rel (%p14) target = $region8
  $region5: #{transformer_lm_forward.8} parent=0 // loop_body
    %s18 = ssub.s32 %s13, 1
    %s19 = ssub.s32 %s13, 2
    %s20 = sadd.s32 %s13, 1
    %s21 = ssub.s32 %s13, %s20
    %p22 = scmp.eq.s32.totalorder %s21, 0
    %s24 = sadd.s32 %s23, 1
    %s25 = scalar_select %p22, %s23, %s24
    %p28 = pneg %p22
    %p29 = scmp.eq.s32.totalorder %s13, 1
    %p30 = por %p28, %p29
    %p31 = scmp.ne.s32.totalorder %s23, %s26
    %p32 = scmp.eq.s32.totalorder %s13, 0
    %p33 = por %p31, %p32
    %p34 = scmp.ne.s32.totalorder %s23, %s26
    %p35 = scmp.eq.s32.totalorder %s18, 1
    %p36 = por %p34, %p35
    %p37 = scmp.ne.s32.totalorder %s26, %s27
    %p38 = scmp.eq.s32.totalorder %s18, 0
    %p39 = por %p37, %p38
    %p40 = scmp.ne.s32.totalorder %s26, %s27
    %p41 = scmp.eq.s32.totalorder %s19, 1
    %p42 = por %p40, %p41
    %p44 = scmp.ne.s32.totalorder %s27, %s43
    %p45 = scmp.eq.s32.totalorder %s19, 0
    %p46 = por %p44, %p45
    %s47 = ssub.s32 %s13, %s20
    %p48 = scmp.eq.s32.totalorder %s47, 0
    %s50 = sadd.s32 %s49, 1
    %s51 = scalar_select %p48, %s49, %s50
    %p54 = pneg %p48
    %p55 = scmp.eq.s32.totalorder %s13, 1
    %p56 = por %p54, %p55
    %p57 = scmp.ne.s32.totalorder %s49, %s52
    %p58 = scmp.eq.s32.totalorder %s13, 0
    %p59 = por %p57, %p58
    %p60 = scmp.ne.s32.totalorder %s49, %s52
    %p61 = scmp.eq.s32.totalorder %s18, 1
    %p62 = por %p60, %p61
    %p63 = scmp.ne.s32.totalorder %s52, %s53
    %p64 = scmp.eq.s32.totalorder %s18, 0
    %p65 = por %p63, %p64
    %p66 = scmp.ne.s32.totalorder %s52, %s53
    %p67 = scmp.eq.s32.totalorder %s19, 1
    %p68 = por %p66, %p67
    %p70 = scmp.ne.s32.totalorder %s53, %s69
    %p71 = scmp.eq.s32.totalorder %s19, 0
    %p72 = por %p70, %p71
    %s73 = ssub.s32 %s13, %s20
    %p74 = scmp.eq.s32.totalorder %s73, 0
    %s76 = sadd.s32 %s75, 1
    %s77 = scalar_select %p74, %s75, %s76
    %p80 = pneg %p74
    %p81 = scmp.eq.s32.totalorder %s13, 1
    %p82 = por %p80, %p81
    %p83 = scmp.ne.s32.totalorder %s75, %s78
    %p84 = scmp.eq.s32.totalorder %s13, 0
    %p85 = por %p83, %p84
    %p86 = scmp.ne.s32.totalorder %s75, %s78
    %p87 = scmp.eq.s32.totalorder %s18, 1
    %p88 = por %p86, %p87
    %p89 = scmp.ne.s32.totalorder %s78, %s79
    %p90 = scmp.eq.s32.totalorder %s18, 0
    %p91 = por %p89, %p90
    %p92 = scmp.ne.s32.totalorder %s78, %s79
    %p93 = scmp.eq.s32.totalorder %s19, 1
    %p94 = por %p92, %p93
    %p96 = scmp.ne.s32.totalorder %s79, %s95
    %p97 = scmp.eq.s32.totalorder %s19, 0
    %p98 = por %p96, %p97
    %s99 = ssub.s32 %s13, %s20
    %p100 = scmp.eq.s32.totalorder %s99, 0
    %s102 = sadd.s32 %s101, 1
    %s103 = scalar_select %p100, %s101, %s102
    %p106 = pneg %p100
    %p107 = scmp.eq.s32.totalorder %s13, 1
    %p108 = por %p106, %p107
    %p109 = scmp.ne.s32.totalorder %s101, %s104
    %p110 = scmp.eq.s32.totalorder %s13, 0
    %p111 = por %p109, %p110
    %p112 = scmp.ne.s32.totalorder %s101, %s104
    %p113 = scmp.eq.s32.totalorder %s18, 1
    %p114 = por %p112, %p113
    %p115 = scmp.ne.s32.totalorder %s104, %s105
    %p116 = scmp.eq.s32.totalorder %s18, 0
    %p117 = por %p115, %p116
    %p118 = scmp.ne.s32.totalorder %s104, %s105
    %p119 = scmp.eq.s32.totalorder %s19, 1
    %p120 = por %p118, %p119
    %p122 = scmp.ne.s32.totalorder %s105, %s121
    %p123 = scmp.eq.s32.totalorder %s19, 0
    %p124 = por %p122, %p123
    %s125 = ssub.s32 %s13, %s20
    %p126 = scmp.eq.s32.totalorder %s125, 0
    %s128 = sadd.s32 %s127, 1
    %s129 = scalar_select %p126, %s127, %s128
    %p132 = pneg %p126
    %p133 = scmp.eq.s32.totalorder %s13, 1
    %p134 = por %p132, %p133
    %p135 = scmp.ne.s32.totalorder %s127, %s130
    %p136 = scmp.eq.s32.totalorder %s13, 0
    %p137 = por %p135, %p136
    %p138 = scmp.ne.s32.totalorder %s127, %s130
    %p139 = scmp.eq.s32.totalorder %s18, 1
    %p140 = por %p138, %p139
    %p141 = scmp.ne.s32.totalorder %s130, %s131
    %p142 = scmp.eq.s32.totalorder %s18, 0
    %p143 = por %p141, %p142
    %p144 = scmp.ne.s32.totalorder %s130, %s131
    %p145 = scmp.eq.s32.totalorder %s19, 1
    %p146 = por %p144, %p145
    %p148 = scmp.ne.s32.totalorder %s131, %s147
    %p149 = scmp.eq.s32.totalorder %s19, 0
    %p150 = por %p148, %p149
    %s152 = sadd.s32 %s151, 1
    %p155 = scmp.eq.s32.totalorder %s13, 1
    %p156 = scmp.ne.s32.totalorder %s151, %s153
    %p157 = scmp.eq.s32.totalorder %s13, 0
    %p158 = por %p156, %p157
    %p159 = scmp.ne.s32.totalorder %s151, %s153
    %p160 = scmp.eq.s32.totalorder %s18, 1
    %p161 = por %p159, %p160
    %p162 = scmp.ne.s32.totalorder %s153, %s154
    %p163 = scmp.eq.s32.totalorder %s18, 0
    %p164 = por %p162, %p163
    %p165 = scmp.ne.s32.totalorder %s153, %s154
    %p166 = scmp.eq.s32.totalorder %s19, 1
    %p167 = por %p165, %p166
    %p169 = scmp.ne.s32.totalorder %s154, %s168
    %p170 = scmp.eq.s32.totalorder %s19, 0
    %p171 = por %p169, %p170
    %s173 = sadd.s32 %s172, 1
    %p176 = scmp.eq.s32.totalorder %s13, 1
    %p177 = scmp.ne.s32.totalorder %s172, %s174
    %p178 = scmp.eq.s32.totalorder %s13, 0
    %p179 = por %p177, %p178
    %p180 = scmp.ne.s32.totalorder %s172, %s174
    %p181 = scmp.eq.s32.totalorder %s18, 1
    %p182 = por %p180, %p181
    %p183 = scmp.ne.s32.totalorder %s174, %s175
    %p184 = scmp.eq.s32.totalorder %s18, 0
    %p185 = por %p183, %p184
    %p186 = scmp.ne.s32.totalorder %s174, %s175
    %p187 = scmp.eq.s32.totalorder %s19, 1
    %p188 = por %p186, %p187
    %p190 = scmp.ne.s32.totalorder %s175, %s189
    %p191 = scmp.eq.s32.totalorder %s19, 0
    %p192 = por %p190, %p191
    %s193 = ssub.s32 %s13, %s20
    %p194 = scmp.eq.s32.totalorder %s193, 0
    %s196 = sadd.s32 %s195, 1
    %s197 = scalar_select %p194, %s195, %s196
    %p200 = pneg %p194
    %p201 = scmp.eq.s32.totalorder %s13, 1
    %p202 = por %p200, %p201
    %p203 = scmp.ne.s32.totalorder %s195, %s198
    %p204 = scmp.eq.s32.totalorder %s13, 0
    %p205 = por %p203, %p204
    %p206 = scmp.ne.s32.totalorder %s195, %s198
    %p207 = scmp.eq.s32.totalorder %s18, 1
    %p208 = por %p206, %p207
    %p209 = scmp.ne.s32.totalorder %s198, %s199
    %p210 = scmp.eq.s32.totalorder %s18, 0
    %p211 = por %p209, %p210
    %p212 = scmp.ne.s32.totalorder %s198, %s199
    %p213 = scmp.eq.s32.totalorder %s19, 1
    %p214 = por %p212, %p213
    %p216 = scmp.ne.s32.totalorder %s199, %s215
    %p217 = scmp.eq.s32.totalorder %s19, 0
    %p218 = por %p216, %p217
    %p219 = scmp.le.s32.totalorder 1, %s13
    %p220 = scmp.lt.s32.totalorder %s13, 3
    %p221 = pnand %p219, %p220
    %p222 = pneg %p221
    // Predicated region
    $region9: #{transformer_lm_forward.8} parent=5 // pred_check
      _
    $region10: #{transformer_lm_forward.8} parent=5 // pred_check_branch
      %224 = sbr.rel (%p221) target = $region12
    $region11: #{transformer_lm_forward.8} parent=5 // pred_region
      %s225 = ssub.s32 %s13, 1
      // Predicated region
      $region13: #{transformer_lm_forward.8} parent=11 // pred_check
        %p226 = pneg %p164
      $region14: #{transformer_lm_forward.8} parent=11 // pred_check_branch
        %228 = sbr.rel (%p226) target = $region16
      $region15: #{transformer_lm_forward.8} parent=11 // pred_region
        _
      $region16: #{transformer_lm_forward.8} parent=11 // pred_fallthru
        _
      // Predicated region
      $region17: #{transformer_lm_forward.8} parent=11 // pred_check
        %p229 = pneg %p185
      $region18: #{transformer_lm_forward.8} parent=11 // pred_check_branch
        %231 = sbr.rel (%p229) target = $region20
      $region19: #{transformer_lm_forward.8} parent=11 // pred_region
        _
      $region20: #{transformer_lm_forward.8} parent=11 // pred_fallthru
        _
    $region12: #{transformer_lm_forward.8} parent=5 // pred_fallthru
      _
    %p232 = scmp.lt.s32.totalorder %s13, 2
    // Predicated region
    $region21: #{transformer_lm_forward.8} parent=5 // pred_check
      %p233 = pneg %p232
    $region22: #{transformer_lm_forward.8} parent=5 // pred_check_branch
      %235 = sbr.rel (%p233) target = $region24
    $region23: #{transformer_lm_forward.8} parent=5 // pred_region
      // Predicated region
      $region25: #{transformer_lm_forward.8} parent=23 // pred_check
        %p236 = pneg %p33
      $region26: #{transformer_lm_forward.8} parent=23 // pred_check_branch
        %238 = sbr.rel (%p236) target = $region28
      $region27: #{transformer_lm_forward.8} parent=23 // pred_region
        %p239 = scmp.lt.s32.totalorder %s13, 1
        %s240 = scalar_select %p239, %s13, 1
        %s241 = smul.addr %s240, 4
        %s242 = smul.addr %s241, 4
        %s243 = scalar_lea.vmem %s0, %s242
      $region28: #{transformer_lm_forward.8} parent=23 // pred_fallthru
        _
      // Predicated region
      $region29: #{transformer_lm_forward.8} parent=23 // pred_check
        %p244 = pneg %p59
      $region30: #{transformer_lm_forward.8} parent=23 // pred_check_branch
        %246 = sbr.rel (%p244) target = $region32
      $region31: #{transformer_lm_forward.8} parent=23 // pred_region
        %p247 = scmp.lt.s32.totalorder %s13, 1
        %s248 = scalar_select %p247, %s13, 1
        %s249 = smul.addr %s248, 4
        %s250 = smul.addr %s249, 4
        %s251 = scalar_lea.vmem %s1, %s250
      $region32: #{transformer_lm_forward.8} parent=23 // pred_fallthru
        _
      // Predicated region
      $region33: #{transformer_lm_forward.8} parent=23 // pred_check
        %p252 = pneg %p85
      $region34: #{transformer_lm_forward.8} parent=23 // pred_check_branch
        %254 = sbr.rel (%p252) target = $region36
      $region35: #{transformer_lm_forward.8} parent=23 // pred_region
        %p255 = scmp.lt.s32.totalorder %s13, 1
        %s256 = scalar_select %p255, %s13, 1
        %s257 = smul.addr %s256, 4
        %s258 = smul.addr %s257, 4
        %s259 = scalar_lea.vmem %s2, %s258
      $region36: #{transformer_lm_forward.8} parent=23 // pred_fallthru
        _
      // Predicated region
      $region37: #{transformer_lm_forward.8} parent=23 // pred_check
        %p260 = pneg %p111
      $region38: #{transformer_lm_forward.8} parent=23 // pred_check_branch
        %262 = sbr.rel (%p260) target = $region40
      $region39: #{transformer_lm_forward.8} parent=23 // pred_region
        %p263 = scmp.lt.s32.totalorder %s13, 1
        %s264 = scalar_select %p263, %s13, 1
        %s265 = smul.addr %s264, 8
        %s266 = scalar_lea.vmem %s3, %s265
      $region40: #{transformer_lm_forward.8} parent=23 // pred_fallthru
        _
      // Predicated region
      $region41: #{transformer_lm_forward.8} parent=23 // pred_check
        %p267 = pneg %p137
      $region42: #{transformer_lm_forward.8} parent=23 // pred_check_branch
        %269 = sbr.rel (%p267) target = $region44
      $region43: #{transformer_lm_forward.8} parent=23 // pred_region
        %p270 = scmp.lt.s32.totalorder %s13, 1
        %s271 = scalar_select %p270, %s13, 1
        %s272 = smul.addr %s271, 8
        %s273 = scalar_lea.vmem %s4, %s272
      $region44: #{transformer_lm_forward.8} parent=23 // pred_fallthru
        _
    $region24: #{transformer_lm_forward.8} parent=5 // pred_fallthru
      _
    %p274 = scmp.le.s32.totalorder 1, %s13
    %p275 = scmp.lt.s32.totalorder %s13, 3
    %p276 = pnand %p274, %p275
    %p277 = pneg %p276
    // Predicated region
    $region45: #{transformer_lm_forward.8} parent=5 // pred_check
      _
    $region46: #{transformer_lm_forward.8} parent=5 // pred_check_branch
      %279 = sbr.rel (%p276) target = $region48
    $region47: #{transformer_lm_forward.8} parent=5 // pred_region
      %s280 = ssub.s32 %s13, 1
      %p281 = scmp.lt.s32.totalorder %s18, 1
      %s282 = scalar_select %p281, %s18, 1
      %s283 = smul.addr %s282, 4
      %s284 = smul.addr %s283, 4
      %s285 = scalar_lea.vmem %s0, %s284
      %p286 = pneg %p39
      %p287 = pneg %p36
      %p288 = scmp.lt.s32.totalorder %s18, 1
      %s289 = scalar_select %p288, %s18, 1
      %s290 = smul.addr %s289, 4
      %s291 = smul.addr %s290, 4
      %s292 = scalar_lea.vmem %s1, %s291
      %p293 = pneg %p65
      %p294 = pneg %p62
      %p295 = scmp.lt.s32.totalorder %s18, 1
      %s296 = scalar_select %p295, %s18, 1
      %s297 = smul.addr %s296, 4
      %s298 = smul.addr %s297, 4
      %s299 = scalar_lea.vmem %s2, %s298
      %p300 = pneg %p91
      %p301 = pneg %p88
      %p302 = scmp.lt.s32.totalorder %s18, 1
      %s303 = scalar_select %p302, %s18, 1
      %s304 = smul.addr %s303, 8
      %s305 = scalar_lea.vmem %s3, %s304
      %p306 = pneg %p117
      %p307 = pneg %p114
      %p308 = scmp.lt.s32.totalorder %s18, 1
      %s309 = scalar_select %p308, %s18, 1
      %s310 = smul.addr %s309, 8
      %s311 = scalar_lea.vmem %s4, %s310
      %p312 = pneg %p143
      %p313 = pneg %p140
      %p314 = pneg %p164
      %p315 = pneg %p161
      %p316 = pneg %p185
      %p317 = pneg %p182
      %p318 = pneg %p211
      %p319 = pneg %p208
      %p320 = scmp.lt.s32.totalorder %s18, 1
      %s321 = scalar_select %p320, %s18, 1
      %s322 = smul.addr %s321, 8
      %s323 = scalar_lea.vmem %s7, %s322
      %p324 = scmp.lt.s32.totalorder %s18, 1
      %s325 = scalar_select %p324, %s18, 1
      %s326 = smul.addr %s325, 4
      %s327 = smul.addr %s326, 4
      %s328 = scalar_lea.vmem %s0, %s327
      %p329 = scmp.lt.s32.totalorder %s18, 1
      %s330 = scalar_select %p329, %s18, 1
      %s331 = smul.addr %s330, 4
      %s332 = smul.addr %s331, 4
      %s333 = scalar_lea.vmem %s1, %s332
      %p334 = scmp.lt.s32.totalorder %s18, 1
      %s335 = scalar_select %p334, %s18, 1
      %s336 = smul.addr %s335, 4
      %s337 = smul.addr %s336, 4
      %s338 = scalar_lea.vmem %s2, %s337
      %p339 = scmp.lt.s32.totalorder %s18, 1
      %s340 = scalar_select %p339, %s18, 1
      %s341 = smul.addr %s340, 8
      %s342 = scalar_lea.vmem %s3, %s341
      %p343 = scmp.lt.s32.totalorder %s18, 1
      %s344 = scalar_select %p343, %s18, 1
      %s345 = smul.addr %s344, 8
      %s346 = scalar_lea.vmem %s4, %s345
      %p347 = scmp.lt.s32.totalorder %s18, 1
      %s348 = scalar_select %p347, %s18, 1
      %s349 = smul.addr %s348, 8
      %s350 = scalar_lea.vmem %s7, %s349
      %v352 = vld [vmem:[%s328] sm:$0xf]
      %v353 = vld [vmem:[%s328 + $0x4] sm:$0xf]
      %v354 = vld [vmem:[%s328 + $0x8] sm:$0xf]
      %v355 = vld [vmem:[%s328 + $0xc] sm:$0xf]
      %v356 = vld [vmem:[%s333] sm:$0xf]
      %v357 = vld [vmem:[%s333 + $0x4] sm:$0xf]
      %v358 = vld [vmem:[%s333 + $0x8] sm:$0xf]
      %v359 = vld [vmem:[%s333 + $0xc] sm:$0xf]
      %v360 = vld [vmem:[%s338] sm:$0xf]
      %v361 = vld [vmem:[%s338 + $0x4] sm:$0xf]
      %v362 = vld [vmem:[%s338 + $0x8] sm:$0xf]
      %v363 = vld [vmem:[%s338 + $0xc] sm:$0xf]
      %vm364 = vcmask 64512
      %v366 = vsel %vm364, %v352, 0
      %v369 = vsel %vm364, %v356, 0
      %371 = vmatprep.subr.bf16.mxu0 0
      %372 = vmatpush1.bf16.xpose.msra.mxu0 %v369
      %373 = vmatprep.subr.bf16.mxu0 0
      %374 = vmatpush1.bf16.xpose.msra.mxu0 0
      %375 = vmatprep.subr.bf16.mxu0 0
      %376 = vmatpush1.bf16.xpose.msra.mxu0 0
      %377 = vmatprep.subr.bf16.mxu0 0
      %378 = vmatpush1.bf16.xpose.msra.mxu0 0
      %379 = vmatprep.subr.bf16.mxu0 0
      %380 = vmatpush1.bf16.xpose.msra.mxu0 0
      %381 = vmatprep.subr.bf16.mxu0 0
      %382 = vmatpush1.bf16.xpose.msra.mxu0 0
      %383 = vmatprep.subr.bf16.mxu0 0
      %384 = vmatpush1.bf16.xpose.msra.mxu0 0
      %385 = vmatprep.subr.bf16.mxu0 0
      %386 = vmatpush1.bf16.xpose.msra.mxu0 0
      %387 = vmatprep.subr.bf16.mxu0 0
      %388 = vmatpush1.bf16.xpose.msra.mxu0 0
      %389 = vmatprep.subr.bf16.mxu0 0
      %390 = vmatpush1.bf16.xpose.msra.mxu0 0
      %391 = vmatprep.subr.bf16.mxu0 0
      %392 = vmatpush1.bf16.xpose.msra.mxu0 0
      %393 = vmatprep.subr.bf16.mxu0 0
      %394 = vmatpush1.bf16.xpose.msra.mxu0 0
      %395 = vmatprep.subr.bf16.mxu0 0
      %396 = vmatpush1.bf16.xpose.msra.mxu0 0
      %397 = vmatprep.subr.bf16.mxu0 0
      %398 = vmatpush1.bf16.xpose.msra.mxu0 0
      %399 = vmatprep.subr.bf16.mxu0 0
      %400 = vmatpush1.bf16.xpose.msra.mxu0 0
      %401 = vmatprep.subr.bf16.mxu0 0
      %402 = vmatpush1.bf16.xpose.msra.mxu0 0
      %403 = vmatprep.mubr.bf16.mxu0 0
      %404 = vmatmul.mubr.bf16.gmra.mrb[0].mxu0 %v366
      %v405 = vpop.f32.mrb[0].mxu0
      %v406 = vadd.f32 0.0, %v405
      %v407 = vpop.f32.mrb[0].mxu0
      %v408 = vpop.f32.mrb[0].mxu0
      %v409 = vpop.f32.mrb[0].mxu0
      %410 = vdwg.mxu0
      %v412 = vsel %vm364, %v353, 0
      %v415 = vsel %vm364, %v357, 0
      %417 = vmatprep.subr.bf16.mxu0 0
      %418 = vmatpush1.bf16.xpose.msra.mxu0 %v415
      %419 = vmatprep.subr.bf16.mxu0 0
      %420 = vmatpush1.bf16.xpose.msra.mxu0 0
      %421 = vmatprep.subr.bf16.mxu0 0
      %422 = vmatpush1.bf16.xpose.msra.mxu0 0
      %423 = vmatprep.subr.bf16.mxu0 0
      %424 = vmatpush1.bf16.xpose.msra.mxu0 0
      %425 = vmatprep.subr.bf16.mxu0 0
      %426 = vmatpush1.bf16.xpose.msra.mxu0 0
      %427 = vmatprep.subr.bf16.mxu0 0
      %428 = vmatpush1.bf16.xpose.msra.mxu0 0
      %429 = vmatprep.subr.bf16.mxu0 0
      %430 = vmatpush1.bf16.xpose.msra.mxu0 0
      %431 = vmatprep.subr.bf16.mxu0 0
      %432 = vmatpush1.bf16.xpose.msra.mxu0 0
      %433 = vmatprep.subr.bf16.mxu0 0
      %434 = vmatpush1.bf16.xpose.msra.mxu0 0
      %435 = vmatprep.subr.bf16.mxu0 0
      %436 = vmatpush1.bf16.xpose.msra.mxu0 0
      %437 = vmatprep.subr.bf16.mxu0 0
      %438 = vmatpush1.bf16.xpose.msra.mxu0 0
      %439 = vmatprep.subr.bf16.mxu0 0
      %440 = vmatpush1.bf16.xpose.msra.mxu0 0
      %441 = vmatprep.subr.bf16.mxu0 0
      %442 = vmatpush1.bf16.xpose.msra.mxu0 0
      %443 = vmatprep.subr.bf16.mxu0 0
      %444 = vmatpush1.bf16.xpose.msra.mxu0 0
      %445 = vmatprep.subr.bf16.mxu0 0
      %446 = vmatpush1.bf16.xpose.msra.mxu0 0
      %447 = vmatprep.subr.bf16.mxu0 0
      %448 = vmatpush1.bf16.xpose.msra.mxu0 0
      %449 = vmatprep.mubr.bf16.mxu0 0
      %450 = vmatmul.mubr.bf16.gmra.mrb[0].mxu0 %v412
      %v451 = vpop.f32.mrb[0].mxu0
      %v452 = vadd.f32 0.0, %v451
      %v453 = vpop.f32.mrb[0].mxu0
      %v454 = vpop.f32.mrb[0].mxu0
      %v455 = vpop.f32.mrb[0].mxu0
      %456 = vdwg.mxu0
      %v458 = vsel %vm364, %v354, 0
      %v461 = vsel %vm364, %v358, 0
      %463 = vmatprep.subr.bf16.mxu0 0
      %464 = vmatpush1.bf16.xpose.msra.mxu0 %v461
      %465 = vmatprep.subr.bf16.mxu0 0
      %466 = vmatpush1.bf16.xpose.msra.mxu0 0
      %467 = vmatprep.subr.bf16.mxu0 0
      %468 = vmatpush1.bf16.xpose.msra.mxu0 0
      %469 = vmatprep.subr.bf16.mxu0 0
      %470 = vmatpush1.bf16.xpose.msra.mxu0 0
      %471 = vmatprep.subr.bf16.mxu0 0
      %472 = vmatpush1.bf16.xpose.msra.mxu0 0
      %473 = vmatprep.subr.bf16.mxu0 0
      %474 = vmatpush1.bf16.xpose.msra.mxu0 0
      %475 = vmatprep.subr.bf16.mxu0 0
      %476 = vmatpush1.bf16.xpose.msra.mxu0 0
      %477 = vmatprep.subr.bf16.mxu0 0
      %478 = vmatpush1.bf16.xpose.msra.mxu0 0
      %479 = vmatprep.subr.bf16.mxu0 0
      %480 = vmatpush1.bf16.xpose.msra.mxu0 0
      %481 = vmatprep.subr.bf16.mxu0 0
      %482 = vmatpush1.bf16.xpose.msra.mxu0 0
      %483 = vmatprep.subr.bf16.mxu0 0
      %484 = vmatpush1.bf16.xpose.msra.mxu0 0
      %485 = vmatprep.subr.bf16.mxu0 0
      %486 = vmatpush1.bf16.xpose.msra.mxu0 0
      %487 = vmatprep.subr.bf16.mxu0 0
      %488 = vmatpush1.bf16.xpose.msra.mxu0 0
      %489 = vmatprep.subr.bf16.mxu0 0
      %490 = vmatpush1.bf16.xpose.msra.mxu0 0
      %491 = vmatprep.subr.bf16.mxu0 0
      %492 = vmatpush1.bf16.xpose.msra.mxu0 0
      %493 = vmatprep.subr.bf16.mxu0 0
      %494 = vmatpush1.bf16.xpose.msra.mxu0 0
      %495 = vmatprep.mubr.bf16.mxu0 0
      %496 = vmatmul.mubr.bf16.gmra.mrb[0].mxu0 %v458
      %v497 = vpop.f32.mrb[0].mxu0
      %v498 = vadd.f32 0.0, %v497
      %v499 = vpop.f32.mrb[0].mxu0
      %v500 = vpop.f32.mrb[0].mxu0
      %v501 = vpop.f32.mrb[0].mxu0
      %502 = vdwg.mxu0
      %v504 = vsel %vm364, %v355, 0
      %v507 = vsel %vm364, %v359, 0
      %509 = vmatprep.subr.bf16.mxu0 0
      %510 = vmatpush1.bf16.xpose.msra.mxu0 %v507
      %511 = vmatprep.subr.bf16.mxu0 0
      %512 = vmatpush1.bf16.xpose.msra.mxu0 0
      %513 = vmatprep.subr.bf16.mxu0 0
      %514 = vmatpush1.bf16.xpose.msra.mxu0 0
      %515 = vmatprep.subr.bf16.mxu0 0
      %516 = vmatpush1.bf16.xpose.msra.mxu0 0
      %517 = vmatprep.subr.bf16.mxu0 0
      %518 = vmatpush1.bf16.xpose.msra.mxu0 0
      %519 = vmatprep.subr.bf16.mxu0 0
      %520 = vmatpush1.bf16.xpose.msra.mxu0 0
      %521 = vmatprep.subr.bf16.mxu0 0
      %522 = vmatpush1.bf16.xpose.msra.mxu0 0
      %523 = vmatprep.subr.bf16.mxu0 0
      %524 = vmatpush1.bf16.xpose.msra.mxu0 0
      %525 = vmatprep.subr.bf16.mxu0 0
      %526 = vmatpush1.bf16.xpose.msra.mxu0 0
      %527 = vmatprep.subr.bf16.mxu0 0
      %528 = vmatpush1.bf16.xpose.msra.mxu0 0
      %529 = vmatprep.subr.bf16.mxu0 0
      %530 = vmatpush1.bf16.xpose.msra.mxu0 0
      %531 = vmatprep.subr.bf16.mxu0 0
      %532 = vmatpush1.bf16.xpose.msra.mxu0 0
      %533 = vmatprep.subr.bf16.mxu0 0
      %534 = vmatpush1.bf16.xpose.msra.mxu0 0
      %535 = vmatprep.subr.bf16.mxu0 0
      %536 = vmatpush1.bf16.xpose.msra.mxu0 0
      %537 = vmatprep.subr.bf16.mxu0 0
      %538 = vmatpush1.bf16.xpose.msra.mxu0 0
      %539 = vmatprep.subr.bf16.mxu0 0
      %540 = vmatpush1.bf16.xpose.msra.mxu0 0
      %541 = vmatprep.mubr.bf16.mxu0 0
      %542 = vmatmul.mubr.bf16.gmra.mrb[0].mxu0 %v504
      %v543 = vpop.f32.mrb[0].mxu0
      %v544 = vadd.f32 0.0, %v543
      %v545 = vpop.f32.mrb[0].mxu0
      %v546 = vpop.f32.mrb[0].mxu0
      %v547 = vpop.f32.mrb[0].mxu0
      %548 = vdwg.mxu0
      %v549 = vld [vmem:[%s342] sm:$0xff]
      %vm550 = vcmp.eq.s32.totalorder %v549, 0
      %v551 = vsel %vm550, 1, 0
      %vm552 = vcmp.eq.s32.totalorder %v551, 1
      %v553 = vsel %vm552, -1e+20, %v406
      %v554 = vsel %vm552, -1e+20, %v452
      %v555 = vsel %vm552, -1e+20, %v498
      %v556 = vsel %vm552, -1e+20, %v544
      %v557 = vsel %vm364, %v553, -inf
      %558 = vmax.xlane.f32.xlu0 %v557
      %v559 = vpop.xlane.xlu0 %558
      %v560 = vsel %vm364, %v554, -inf
      %561 = vmax.xlane.f32.xlu0 %v560
      %v562 = vpop.xlane.xlu0 %561
      %v563 = vsel %vm364, %v555, -inf
      %564 = vmax.xlane.f32.xlu0 %v563
      %v565 = vpop.xlane.xlu0 %564
      %v566 = vsel %vm364, %v556, -inf
      %567 = vmax.xlane.f32.xlu0 %v566
      %v568 = vpop.xlane.xlu0 %567
      %v569 = vsub.f32 %v553, %v559
      %v570 = vsub.f32 %v554, %v562
      %v571 = vsub.f32 %v555, %v565
      %v572 = vsub.f32 %v556, %v568
      %v573 = vmul.f32 %v569, 1.442695
      %v574 = vpow.pop %v573
      %v575 = vmul.f32 %v570, 1.442695
      %v576 = vpow.pop %v575
      %v577 = vmul.f32 %v571, 1.442695
      %v578 = vpow.pop %v577
      %v579 = vmul.f32 %v572, 1.442695
      %v580 = vpow.pop %v579
      %v581 = vsel %vm364, %v574, 0.0
      %582 = vadd.xlane.f32.xlu0 %v581
      %v583 = vpop.xlane.xlu0 %582
      %v584 = vsel %vm364, %v576, 0.0
      %585 = vadd.xlane.f32.xlu0 %v584
      %v586 = vpop.xlane.xlu0 %585
      %v587 = vsel %vm364, %v578, 0.0
      %588 = vadd.xlane.f32.xlu0 %v587
      %v589 = vpop.xlane.xlu0 %588
      %v590 = vsel %vm364, %v580, 0.0
      %591 = vadd.xlane.f32.xlu0 %v590
      %v592 = vpop.xlane.xlu0 %591
      %v593 = vrcp.pop %v583
      %v594 = vrcp.pop %v586
      %v595 = vrcp.pop %v589
      %v596 = vrcp.pop %v592
      %v597 = vmul.f32 %v574, %v593
      %v598 = vmul.f32 %v576, %v594
      %v599 = vmul.f32 %v578, %v595
      %v600 = vmul.f32 %v580, %v596
      %v601 = vpack.c.bf16 %v597, %v597
      %v602 = vpack.c.bf16 %v598, %v598
      %v603 = vpack.c.bf16 %v599, %v599
      %v604 = vpack.c.bf16 %v600, %v600
      %v606 = vsel %vm364, %v601, 0
      %vm608 = vcmask 1043456
      %v610 = vsel %vm608, %v360, 0
      %612 = vmatprep.subr.bf16.mxu0 0
      %613 = vmatpush1.bf16.msra.mxu0 %v610
      %614 = vmatprep.subr.bf16.mxu0 0
      %615 = vmatpush1.bf16.msra.mxu0 0
      %616 = vmatprep.subr.bf16.mxu0 0
      %617 = vmatpush1.bf16.msra.mxu0 0
      %618 = vmatprep.subr.bf16.mxu0 0
      %619 = vmatpush1.bf16.msra.mxu0 0
      %620 = vmatprep.subr.bf16.mxu0 0
      %621 = vmatpush1.bf16.msra.mxu0 0
      %622 = vmatprep.subr.bf16.mxu0 0
      %623 = vmatpush1.bf16.msra.mxu0 0
      %624 = vmatprep.subr.bf16.mxu0 0
      %625 = vmatpush1.bf16.msra.mxu0 0
      %626 = vmatprep.subr.bf16.mxu0 0
      %627 = vmatpush1.bf16.msra.mxu0 0
      %628 = vmatprep.subr.bf16.mxu0 0
      %629 = vmatpush1.bf16.msra.mxu0 0
      %630 = vmatprep.subr.bf16.mxu0 0
      %631 = vmatpush1.bf16.msra.mxu0 0
      %632 = vmatprep.subr.bf16.mxu0 0
      %633 = vmatpush1.bf16.msra.mxu0 0
      %634 = vmatprep.subr.bf16.mxu0 0
      %635 = vmatpush1.bf16.msra.mxu0 0
      %636 = vmatprep.subr.bf16.mxu0 0
      %637 = vmatpush1.bf16.msra.mxu0 0
      %638 = vmatprep.subr.bf16.mxu0 0
      %639 = vmatpush1.bf16.msra.mxu0 0
      %640 = vmatprep.subr.bf16.mxu0 0
      %641 = vmatpush1.bf16.msra.mxu0 0
      %642 = vmatprep.subr.bf16.mxu0 0
      %643 = vmatpush1.bf16.msra.mxu0 0
      %644 = vmatprep.mubr.bf16.mxu0 0
      %645 = vmatmul.mubr.bf16.gmra.mrb[0].mxu0 %v606
      %v646 = vpop.f32.mrb[0].mxu0
      %v647 = vadd.f32 0.0, %v646
      %v648 = vpop.f32.mrb[0].mxu0
      %v649 = vpop.f32.mrb[0].mxu0
      %v650 = vpop.f32.mrb[0].mxu0
      %651 = vdwg.mxu0
      %v653 = vsel %vm364, %v602, 0
      %v656 = vsel %vm608, %v361, 0
      %658 = vmatprep.subr.bf16.mxu0 0
      %659 = vmatpush1.bf16.msra.mxu0 %v656
      %660 = vmatprep.subr.bf16.mxu0 0
      %661 = vmatpush1.bf16.msra.mxu0 0
      %662 = vmatprep.subr.bf16.mxu0 0
      %663 = vmatpush1.bf16.msra.mxu0 0
      %664 = vmatprep.subr.bf16.mxu0 0
      %665 = vmatpush1.bf16.msra.mxu0 0
      %666 = vmatprep.subr.bf16.mxu0 0
      %667 = vmatpush1.bf16.msra.mxu0 0
      %668 = vmatprep.subr.bf16.mxu0 0
      %669 = vmatpush1.bf16.msra.mxu0 0
      %670 = vmatprep.subr.bf16.mxu0 0
      %671 = vmatpush1.bf16.msra.mxu0 0
      %672 = vmatprep.subr.bf16.mxu0 0
      %673 = vmatpush1.bf16.msra.mxu0 0
      %674 = vmatprep.subr.bf16.mxu0 0
      %675 = vmatpush1.bf16.msra.mxu0 0
      %676 = vmatprep.subr.bf16.mxu0 0
      %677 = vmatpush1.bf16.msra.mxu0 0
      %678 = vmatprep.subr.bf16.mxu0 0
      %679 = vmatpush1.bf16.msra.mxu0 0
      %680 = vmatprep.subr.bf16.mxu0 0
      %681 = vmatpush1.bf16.msra.mxu0 0
      %682 = vmatprep.subr.bf16.mxu0 0
      %683 = vmatpush1.bf16.msra.mxu0 0
      %684 = vmatprep.subr.bf16.mxu0 0
      %685 = vmatpush1.bf16.msra.mxu0 0
      %686 = vmatprep.subr.bf16.mxu0 0
      %687 = vmatpush1.bf16.msra.mxu0 0
      %688 = vmatprep.subr.bf16.mxu0 0
      %689 = vmatpush1.bf16.msra.mxu0 0
      %690 = vmatprep.mubr.bf16.mxu0 0
      %691 = vmatmul.mubr.bf16.gmra.mrb[0].mxu0 %v653
      %v692 = vpop.f32.mrb[0].mxu0
      %v693 = vadd.f32 0.0, %v692
      %v694 = vpop.f32.mrb[0].mxu0
      %v695 = vpop.f32.mrb[0].mxu0
      %v696 = vpop.f32.mrb[0].mxu0
      %697 = vdwg.mxu0
      %v699 = vsel %vm364, %v603, 0
      %v702 = vsel %vm608, %v362, 0
      %704 = vmatprep.subr.bf16.mxu0 0
      %705 = vmatpush1.bf16.msra.mxu0 %v702
      %706 = vmatprep.subr.bf16.mxu0 0
      %707 = vmatpush1.bf16.msra.mxu0 0
      %708 = vmatprep.subr.bf16.mxu0 0
      %709 = vmatpush1.bf16.msra.mxu0 0
      %710 = vmatprep.subr.bf16.mxu0 0
      %711 = vmatpush1.bf16.msra.mxu0 0
      %712 = vmatprep.subr.bf16.mxu0 0
      %713 = vmatpush1.bf16.msra.mxu0 0
      %714 = vmatprep.subr.bf16.mxu0 0
      %715 = vmatpush1.bf16.msra.mxu0 0
      %716 = vmatprep.subr.bf16.mxu0 0
      %717 = vmatpush1.bf16.msra.mxu0 0
      %718 = vmatprep.subr.bf16.mxu0 0
      %719 = vmatpush1.bf16.msra.mxu0 0
      %720 = vmatprep.subr.bf16.mxu0 0
      %721 = vmatpush1.bf16.msra.mxu0 0
      %722 = vmatprep.subr.bf16.mxu0 0
      %723 = vmatpush1.bf16.msra.mxu0 0
      %724 = vmatprep.subr.bf16.mxu0 0
      %725 = vmatpush1.bf16.msra.mxu0 0
      %726 = vmatprep.subr.bf16.mxu0 0
      %727 = vmatpush1.bf16.msra.mxu0 0
      %728 = vmatprep.subr.bf16.mxu0 0
      %729 = vmatpush1.bf16.msra.mxu0 0
      %730 = vmatprep.subr.bf16.mxu0 0
      %731 = vmatpush1.bf16.msra.mxu0 0
      %732 = vmatprep.subr.bf16.mxu0 0
      %733 = vmatpush1.bf16.msra.mxu0 0
      %734 = vmatprep.subr.bf16.mxu0 0
      %735 = vmatpush1.bf16.msra.mxu0 0
      %736 = vmatprep.mubr.bf16.mxu0 0
      %737 = vmatmul.mubr.bf16.gmra.mrb[0].mxu0 %v699
      %v738 = vpop.f32.mrb[0].mxu0
      %v739 = vadd.f32 0.0, %v738
      %v740 = vpop.f32.mrb[0].mxu0
      %v741 = vpop.f32.mrb[0].mxu0
      %v742 = vpop.f32.mrb[0].mxu0
      %743 = vdwg.mxu0
      %v745 = vsel %vm364, %v604, 0
      %v748 = vsel %vm608, %v363, 0
      %750 = vmatprep.subr.bf16.mxu0 0
      %751 = vmatpush1.bf16.msra.mxu0 %v748
      %752 = vmatprep.subr.bf16.mxu0 0
      %753 = vmatpush1.bf16.msra.mxu0 0
      %754 = vmatprep.subr.bf16.mxu0 0
      %755 = vmatpush1.bf16.msra.mxu0 0
      %756 = vmatprep.subr.bf16.mxu0 0
      %757 = vmatpush1.bf16.msra.mxu0 0
      %758 = vmatprep.subr.bf16.mxu0 0
      %759 = vmatpush1.bf16.msra.mxu0 0
      %760 = vmatprep.subr.bf16.mxu0 0
      %761 = vmatpush1.bf16.msra.mxu0 0
      %762 = vmatprep.subr.bf16.mxu0 0
      %763 = vmatpush1.bf16.msra.mxu0 0
      %764 = vmatprep.subr.bf16.mxu0 0
      %765 = vmatpush1.bf16.msra.mxu0 0
      %766 = vmatprep.subr.bf16.mxu0 0
      %767 = vmatpush1.bf16.msra.mxu0 0
      %768 = vmatprep.subr.bf16.mxu0 0
      %769 = vmatpush1.bf16.msra.mxu0 0
      %770 = vmatprep.subr.bf16.mxu0 0
      %771 = vmatpush1.bf16.msra.mxu0 0
      %772 = vmatprep.subr.bf16.mxu0 0
      %773 = vmatpush1.bf16.msra.mxu0 0
      %774 = vmatprep.subr.bf16.mxu0 0
      %775 = vmatpush1.bf16.msra.mxu0 0
      %776 = vmatprep.subr.bf16.mxu0 0
      %777 = vmatpush1.bf16.msra.mxu0 0
      %778 = vmatprep.subr.bf16.mxu0 0
      %779 = vmatpush1.bf16.msra.mxu0 0
      %780 = vmatprep.subr.bf16.mxu0 0
      %781 = vmatpush1.bf16.msra.mxu0 0
      %782 = vmatprep.mubr.bf16.mxu0 0
      %783 = vmatmul.mubr.bf16.gmra.mrb[0].mxu0 %v745
      %v784 = vpop.f32.mrb[0].mxu0
      %v785 = vadd.f32 0.0, %v784
      %v786 = vpop.f32.mrb[0].mxu0
      %v787 = vpop.f32.mrb[0].mxu0
      %v788 = vpop.f32.mrb[0].mxu0
      %789 = vdwg.mxu0
      %v790 = vld [vmem:[%s346] sm:$0xff]
      %v791 = vld [vmem:[%s6] sm:$0x1]
      %v793 = vlaneseq
      %v794 = vshrl.u32 %v793, 7
      %v795 = vsub.s32 0, %v794
      %v796 = vrot.slane %v791, %v795
      %v798 = vadd.f32 %v790, %v796
      %v799 = vpack.c.bf16 %v647, %v647
      %v800 = vld [vmem:[%s5] sm:$0xf]
      %v802 = vsel %vm364, %v799, 0
      %v805 = vsel %vm608, %v800, 0
      %807 = vmatprep.subr.bf16.mxu0 0
      %808 = vmatpush1.bf16.msra.mxu0 %v805
      %809 = vmatprep.subr.bf16.mxu0 0
      %810 = vmatpush1.bf16.msra.mxu0 0
      %811 = vmatprep.subr.bf16.mxu0 0
      %812 = vmatpush1.bf16.msra.mxu0 0
      %813 = vmatprep.subr.bf16.mxu0 0
      %814 = vmatpush1.bf16.msra.mxu0 0
      %815 = vmatprep.subr.bf16.mxu0 0
      %816 = vmatpush1.bf16.msra.mxu0 0
      %817 = vmatprep.subr.bf16.mxu0 0
      %818 = vmatpush1.bf16.msra.mxu0 0
      %819 = vmatprep.subr.bf16.mxu0 0
      %820 = vmatpush1.bf16.msra.mxu0 0
      %821 = vmatprep.subr.bf16.mxu0 0
      %822 = vmatpush1.bf16.msra.mxu0 0
      %823 = vmatprep.subr.bf16.mxu0 0
      %824 = vmatpush1.bf16.msra.mxu0 0
      %825 = vmatprep.subr.bf16.mxu0 0
      %826 = vmatpush1.bf16.msra.mxu0 0
      %827 = vmatprep.subr.bf16.mxu0 0
      %828 = vmatpush1.bf16.msra.mxu0 0
      %829 = vmatprep.subr.bf16.mxu0 0
      %830 = vmatpush1.bf16.msra.mxu0 0
      %831 = vmatprep.subr.bf16.mxu0 0
      %832 = vmatpush1.bf16.msra.mxu0 0
      %833 = vmatprep.subr.bf16.mxu0 0
      %834 = vmatpush1.bf16.msra.mxu0 0
      %835 = vmatprep.subr.bf16.mxu0 0
      %836 = vmatpush1.bf16.msra.mxu0 0
      %837 = vmatprep.subr.bf16.mxu0 0
      %838 = vmatpush1.bf16.msra.mxu0 0
      %839 = vmatprep.mubr.bf16.mxu0 0
      %840 = vmatmul.mubr.bf16.gmra.mrb[0].mxu0 %v802
      %v841 = vpop.f32.mrb[0].mxu0
      %v842 = vadd.f32 0.0, %v841
      %v843 = vpop.f32.mrb[0].mxu0
      %v844 = vpop.f32.mrb[0].mxu0
      %v845 = vpop.f32.mrb[0].mxu0
      %846 = vdwg.mxu0
      %v847 = vadd.f32 %v798, %v842
      %v848 = vpack.c.bf16 %v693, %v693
      %s849 = scalar_lea.vmem %s5, 4
      %v850 = vld [vmem:[%s849] sm:$0xf]
      %v852 = vsel %vm364, %v848, 0
      %v855 = vsel %vm608, %v850, 0
      %857 = vmatprep.subr.bf16.mxu0 0
      %858 = vmatpush1.bf16.msra.mxu0 %v855
      %859 = vmatprep.subr.bf16.mxu0 0
      %860 = vmatpush1.bf16.msra.mxu0 0
      %861 = vmatprep.subr.bf16.mxu0 0
      %862 = vmatpush1.bf16.msra.mxu0 0
      %863 = vmatprep.subr.bf16.mxu0 0
      %864 = vmatpush1.bf16.msra.mxu0 0
      %865 = vmatprep.subr.bf16.mxu0 0
      %866 = vmatpush1.bf16.msra.mxu0 0
      %867 = vmatprep.subr.bf16.mxu0 0
      %868 = vmatpush1.bf16.msra.mxu0 0
      %869 = vmatprep.subr.bf16.mxu0 0
      %870 = vmatpush1.bf16.msra.mxu0 0
      %871 = vmatprep.subr.bf16.mxu0 0
      %872 = vmatpush1.bf16.msra.mxu0 0
      %873 = vmatprep.subr.bf16.mxu0 0
      %874 = vmatpush1.bf16.msra.mxu0 0
      %875 = vmatprep.subr.bf16.mxu0 0
      %876 = vmatpush1.bf16.msra.mxu0 0
      %877 = vmatprep.subr.bf16.mxu0 0
      %878 = vmatpush1.bf16.msra.mxu0 0
      %879 = vmatprep.subr.bf16.mxu0 0
      %880 = vmatpush1.bf16.msra.mxu0 0
      %881 = vmatprep.subr.bf16.mxu0 0
      %882 = vmatpush1.bf16.msra.mxu0 0
      %883 = vmatprep.subr.bf16.mxu0 0
      %884 = vmatpush1.bf16.msra.mxu0 0
      %885 = vmatprep.subr.bf16.mxu0 0
      %886 = vmatpush1.bf16.msra.mxu0 0
      %887 = vmatprep.subr.bf16.mxu0 0
      %888 = vmatpush1.bf16.msra.mxu0 0
      %889 = vmatprep.mubr.bf16.mxu0 0
      %890 = vmatmul.mubr.bf16.gmra.mrb[0].mxu0 %v852
      %v891 = vpop.f32.mrb[0].mxu0
      %v892 = vadd.f32 0.0, %v891
      %v893 = vpop.f32.mrb[0].mxu0
      %v894 = vpop.f32.mrb[0].mxu0
      %v895 = vpop.f32.mrb[0].mxu0
      %896 = vdwg.mxu0
      %v897 = vadd.f32 %v847, %v892
      %v898 = vpack.c.bf16 %v739, %v739
      %s899 = scalar_lea.vmem %s5, 8
      %v900 = vld [vmem:[%s899] sm:$0xf]
      %v902 = vsel %vm364, %v898, 0
      %v905 = vsel %vm608, %v900, 0
      %907 = vmatprep.subr.bf16.mxu0 0
      %908 = vmatpush1.bf16.msra.mxu0 %v905
      %909 = vmatprep.subr.bf16.mxu0 0
      %910 = vmatpush1.bf16.msra.mxu0 0
      %911 = vmatprep.subr.bf16.mxu0 0
      %912 = vmatpush1.bf16.msra.mxu0 0
      %913 = vmatprep.subr.bf16.mxu0 0
      %914 = vmatpush1.bf16.msra.mxu0 0
      %915 = vmatprep.subr.bf16.mxu0 0
      %916 = vmatpush1.bf16.msra.mxu0 0
      %917 = vmatprep.subr.bf16.mxu0 0
      %918 = vmatpush1.bf16.msra.mxu0 0
      %919 = vmatprep.subr.bf16.mxu0 0
      %920 = vmatpush1.bf16.msra.mxu0 0
      %921 = vmatprep.subr.bf16.mxu0 0
      %922 = vmatpush1.bf16.msra.mxu0 0
      %923 = vmatprep.subr.bf16.mxu0 0
      %924 = vmatpush1.bf16.msra.mxu0 0
      %925 = vmatprep.subr.bf16.mxu0 0
      %926 = vmatpush1.bf16.msra.mxu0 0
      %927 = vmatprep.subr.bf16.mxu0 0
      %928 = vmatpush1.bf16.msra.mxu0 0
      %929 = vmatprep.subr.bf16.mxu0 0
      %930 = vmatpush1.bf16.msra.mxu0 0
      %931 = vmatprep.subr.bf16.mxu0 0
      %932 = vmatpush1.bf16.msra.mxu0 0
      %933 = vmatprep.subr.bf16.mxu0 0
      %934 = vmatpush1.bf16.msra.mxu0 0
      %935 = vmatprep.subr.bf16.mxu0 0
      %936 = vmatpush1.bf16.msra.mxu0 0
      %937 = vmatprep.subr.bf16.mxu0 0
      %938 = vmatpush1.bf16.msra.mxu0 0
      %939 = vmatprep.mubr.bf16.mxu0 0
      %940 = vmatmul.mubr.bf16.gmra.mrb[0].mxu0 %v902
      %v941 = vpop.f32.mrb[0].mxu0
      %v942 = vadd.f32 0.0, %v941
      %v943 = vpop.f32.mrb[0].mxu0
      %v944 = vpop.f32.mrb[0].mxu0
      %v945 = vpop.f32.mrb[0].mxu0
      %946 = vdwg.mxu0
      %v947 = vadd.f32 %v897, %v942
      %v948 = vpack.c.bf16 %v785, %v785
      %s949 = scalar_lea.vmem %s5, 12
      %v950 = vld [vmem:[%s949] sm:$0xf]
      %v952 = vsel %vm364, %v948, 0
      %v955 = vsel %vm608, %v950, 0
      %957 = vmatprep.subr.bf16.mxu0 0
      %958 = vmatpush1.bf16.msra.mxu0 %v955
      %959 = vmatprep.subr.bf16.mxu0 0
      %960 = vmatpush1.bf16.msra.mxu0 0
      %961 = vmatprep.subr.bf16.mxu0 0
      %962 = vmatpush1.bf16.msra.mxu0 0
      %963 = vmatprep.subr.bf16.mxu0 0
      %964 = vmatpush1.bf16.msra.mxu0 0
      %965 = vmatprep.subr.bf16.mxu0 0
      %966 = vmatpush1.bf16.msra.mxu0 0
      %967 = vmatprep.subr.bf16.mxu0 0
      %968 = vmatpush1.bf16.msra.mxu0 0
      %969 = vmatprep.subr.bf16.mxu0 0
      %970 = vmatpush1.bf16.msra.mxu0 0
      %971 = vmatprep.subr.bf16.mxu0 0
      %972 = vmatpush1.bf16.msra.mxu0 0
      %973 = vmatprep.subr.bf16.mxu0 0
      %974 = vmatpush1.bf16.msra.mxu0 0
      %975 = vmatprep.subr.bf16.mxu0 0
      %976 = vmatpush1.bf16.msra.mxu0 0
      %977 = vmatprep.subr.bf16.mxu0 0
      %978 = vmatpush1.bf16.msra.mxu0 0
      %979 = vmatprep.subr.bf16.mxu0 0
      %980 = vmatpush1.bf16.msra.mxu0 0
      %981 = vmatprep.subr.bf16.mxu0 0
      %982 = vmatpush1.bf16.msra.mxu0 0
      %983 = vmatprep.subr.bf16.mxu0 0
      %984 = vmatpush1.bf16.msra.mxu0 0
      %985 = vmatprep.subr.bf16.mxu0 0
      %986 = vmatpush1.bf16.msra.mxu0 0
      %987 = vmatprep.subr.bf16.mxu0 0
      %988 = vmatpush1.bf16.msra.mxu0 0
      %989 = vmatprep.mubr.bf16.mxu0 0
      %990 = vmatmul.mubr.bf16.gmra.mrb[0].mxu0 %v952
      %v991 = vpop.f32.mrb[0].mxu0
      %v992 = vadd.f32 0.0, %v991
      %v993 = vpop.f32.mrb[0].mxu0
      %v994 = vpop.f32.mrb[0].mxu0
      %v995 = vpop.f32.mrb[0].mxu0
      %996 = vdwg.mxu0
      %v997 = vadd.f32 %v947, %v992
      %vm998 = vcmask 261120
      %999 = vst.msk [vmem:[%s350] sm:$0xff] %vm998, %v997
      %p1000 = scmp.lt.s32.totalorder %s18, 1
      %s1001 = scalar_select %p1000, %s18, 1
      %s1002 = smul.addr %s1001, 8
      %s1003 = scalar_lea.vmem %s7, %s1002
      // Predicated region
      $region49: #{transformer_lm_forward.8} parent=47 // pred_check
        %p1004 = pneg %p208
      $region50: #{transformer_lm_forward.8} parent=47 // pred_check_branch
        %1006 = sbr.rel (%p1004) target = $region52
      $region51: #{transformer_lm_forward.8} parent=47 // pred_region
        _
      $region52: #{transformer_lm_forward.8} parent=47 // pred_fallthru
        _
    $region48: #{transformer_lm_forward.8} parent=5 // pred_fallthru
      _
    %p1007 = scmp.le.s32.totalorder 2, %s13
    // Predicated region
    $region53: #{transformer_lm_forward.8} parent=5 // pred_check
      %p1008 = pneg %p1007
    $region54: #{transformer_lm_forward.8} parent=5 // pred_check_branch
      %1010 = sbr.rel (%p1008) target = $region56
    $region55: #{transformer_lm_forward.8} parent=5 // pred_region
      %s1011 = ssub.s32 %s13, 2
      // Predicated region
      $region57: #{transformer_lm_forward.8} parent=55 // pred_check
        %p1012 = pneg %p214
      $region58: #{transformer_lm_forward.8} parent=55 // pred_check_branch
        %1014 = sbr.rel (%p1012) target = $region60
      $region59: #{transformer_lm_forward.8} parent=55 // pred_region
        %p1015 = scmp.lt.s32.totalorder %s19, 1
        %s1016 = scalar_select %p1015, %s19, 1
        %s1017 = smul.addr %s1016, 8
        %s1018 = scalar_lea.vmem %s7, %s1017
      $region60: #{transformer_lm_forward.8} parent=55 // pred_fallthru
        _
    $region56: #{transformer_lm_forward.8} parent=5 // pred_fallthru
      _
  $region6: #{transformer_lm_forward.8} parent=0 // loop_footer
    %s17 = sadd.s32 1, %s13
  $region7: #{transformer_lm_forward.8} parent=0 // loop_footer_branch
    %12 = sbr.rel target = $region3
  $region8: #{transformer_lm_forward.8} parent=0 // loop_exit
    _

// kernel: transformer_lm_forward.13
$region0: #{transformer_lm_forward.13}
  #allocation0 [shape = 'u32[]', space=smem, size = 0x4, offset = 0x4, fixed_abs, tag = 'smem constant byte address 0x4 - core index']
  #allocation1 [shape = 'u32[144,128]{1,0:T(1,128)}', space=vmem, size = 0x12000, scoped, tag = 'internal scratch']
  #allocation2 [shape = 'bf16[16,32]{1,0:T(16,128)(2,1)}', space=vmem, size = 0x1000, scoped, tag = 'scratch operand']
  %s0 = inlined_call_operand.vmem [shape: f32[16,32], index: 0, kind: input, shape index: {}]
  %s1 = inlined_call_operand.vmem [shape: f32[1,32], index: 1, kind: input, shape index: {}]
  %s2 = inlined_call_operand.vmem [shape: f32[1,32], index: 2, kind: input, shape index: {}]
  %s3 = inlined_call_operand.vmem [shape: bf16[32,32], index: 3, kind: input, shape index: {}]
  %s4 = inlined_call_operand.vmem [shape: f32[1,32], index: 4, kind: input, shape index: {}]
  %s5 = inlined_call_operand.vmem [shape: bf16[32,64], index: 5, kind: input, shape index: {}]
  %s6 = inlined_call_operand.vmem [shape: f32[1,64], index: 6, kind: input, shape index: {}]
  %s7 = inlined_call_operand.hbm [shape: f32[16,64], index: 7, kind: output, shape index: {0}]
  %s8 = inlined_call_operand.hbm [shape: f32[16,32], index: 8, kind: output, shape index: {1}]
  %9 = xla_tuple %s7, %s8
  %s10 = sld [smem:[#allocation0]]
  $region50: #{transformer_lm_forward.13} parent=0
    _
  %s12 = ssub.s32 1, %s10
  %s13 = scalar_select 0, %s12, %s10
  $region1: #{transformer_lm_forward.13} parent=0
    #allocation3 [shape = 'u8[8192]{0}', space=vmem, size = 0x2000, scoped, tag = 'output window, operand 0, single buffered']
    #allocation4 [shape = 's32[1]{0}', space=sflag, size = 0x4, scoped, tag = 'scoped memory for transformer_lm_forward.13']
    #allocation5 [shape = 'u8[8192]{0}', space=vmem, size = 0x2000, scoped, tag = 'output window, operand 1, single buffered']
    #allocation6 [shape = 's32[1]{0}', space=sflag, size = 0x4, scoped, tag = 'scoped memory for transformer_lm_forward.13']
    %14 = vsyncpa [#allocation4], 0
    %15 = vsyncpa [#allocation6], 0
    // Predicated region
    $region2: #{transformer_lm_forward.13} parent=1 // pred_check
      _
    $region3: #{transformer_lm_forward.13} parent=1 // pred_check_branch
      %17 = sbr.rel (0) target = $region5
    $region4: #{transformer_lm_forward.13} parent=1 // pred_region
      _
    $region5: #{transformer_lm_forward.13} parent=1 // pred_fallthru
      _
    // Predicated region
    $region6: #{transformer_lm_forward.13} parent=1 // pred_check
      _
    $region7: #{transformer_lm_forward.13} parent=1 // pred_check_branch
      %19 = sbr.rel (0) target = $region9
    $region8: #{transformer_lm_forward.13} parent=1 // pred_region
      _
    $region9: #{transformer_lm_forward.13} parent=1 // pred_fallthru
      _
    // Predicated region
    $region10: #{transformer_lm_forward.13} parent=1 // pred_check
      _
    $region11: #{transformer_lm_forward.13} parent=1 // pred_check_branch
      %21 = sbr.rel (0) target = $region13
    $region12: #{transformer_lm_forward.13} parent=1 // pred_region
      _
    $region13: #{transformer_lm_forward.13} parent=1 // pred_fallthru
      _
    // Predicated region
    $region14: #{transformer_lm_forward.13} parent=1 // pred_check
      _
    $region15: #{transformer_lm_forward.13} parent=1 // pred_check_branch
      %23 = sbr.rel (0) target = $region17
    $region16: #{transformer_lm_forward.13} parent=1 // pred_region
      _
    $region17: #{transformer_lm_forward.13} parent=1 // pred_fallthru
      _
    // Predicated region
    $region18: #{transformer_lm_forward.13} parent=1 // pred_check
      _
    $region19: #{transformer_lm_forward.13} parent=1 // pred_check_branch
      %25 = sbr.rel (0) target = $region21
    $region20: #{transformer_lm_forward.13} parent=1 // pred_region
      _
    $region21: #{transformer_lm_forward.13} parent=1 // pred_fallthru
      _
    // Predicated region
    $region22: #{transformer_lm_forward.13} parent=1 // pred_check
      _
    $region23: #{transformer_lm_forward.13} parent=1 // pred_check_branch
      %27 = sbr.rel (0) target = $region25
    $region24: #{transformer_lm_forward.13} parent=1 // pred_region
      _
    $region25: #{transformer_lm_forward.13} parent=1 // pred_fallthru
      _
    // Predicated region
    $region26: #{transformer_lm_forward.13} parent=1 // pred_check
      _
    $region27: #{transformer_lm_forward.13} parent=1 // pred_check_branch
      %29 = sbr.rel (0) target = $region29
    $region28: #{transformer_lm_forward.13} parent=1 // pred_region
      _
    $region29: #{transformer_lm_forward.13} parent=1 // pred_fallthru
      _
    %p31 = scmp.eq.s32.totalorder 0, 0
    // Predicated region
    $region30: #{transformer_lm_forward.13} parent=1 // pred_check
      %p32 = pneg %p31
    $region31: #{transformer_lm_forward.13} parent=1 // pred_check_branch
      %34 = sbr.rel (%p32) target = $region33
    $region32: #{transformer_lm_forward.13} parent=1 // pred_region
      %v35 = vld [vmem:[%s0] sm:$0xff]
      %v36 = vld [vmem:[%s0 + $0x8] sm:$0xff]
      %vm37 = vcmask 261120
      %v38 = vsel %vm37, %v35, 0.0
      %39 = vadd.xlane.f32.xlu0 %v38
      %v40 = vpop.xlane.xlu0 %39
      %v41 = vsel %vm37, %v36, 0.0
      %42 = vadd.xlane.f32.xlu0 %v41
      %v43 = vpop.xlane.xlu0 %42
      %v44 = vrcp.pop 32.0
      %v45 = vmul.f32 %v40, %v44
      %v46 = vmul.f32 %v43, %v44
      %v47 = vsub.f32 %v35, %v45
      %v48 = vsub.f32 %v36, %v46
      %v49 = vmul.f32 %v47, %v47
      %v50 = vmul.f32 %v48, %v48
      %v51 = vsel %vm37, %v49, 0.0
      %52 = vadd.xlane.f32.xlu0 %v51
      %v53 = vpop.xlane.xlu0 %52
      %v54 = vsel %vm37, %v50, 0.0
      %55 = vadd.xlane.f32.xlu0 %v54
      %v56 = vpop.xlane.xlu0 %55
      %v57 = vmul.f32 %v53, %v44
      %v58 = vmul.f32 %v56, %v44
      %v59 = vadd.f32 %v57, 1e-05
      %v60 = vadd.f32 %v58, 1e-05
      %v61 = vrsqrt.pop %v59
      %v62 = vrsqrt.pop %v60
      %v63 = vmul.f32 %v47, %v61
      %v64 = vmul.f32 %v48, %v62
      %v65 = vld [vmem:[%s1] sm:$0x1]
      %v67 = vlaneseq
      %v68 = vshrl.u32 %v67, 7
      %v69 = vsub.s32 0, %v68
      %v70 = vrot.slane %v65, %v69
      %v72 = vmul.f32 %v63, %v70
      %v73 = vmul.f32 %v64, %v70
      %v74 = vld [vmem:[%s2] sm:$0x1]
      %v76 = vlaneseq
      %v77 = vshrl.u32 %v76, 7
      %v78 = vsub.s32 0, %v77
      %v79 = vrot.slane %v74, %v78
      %v81 = vadd.f32 %v72, %v79
      %v82 = vadd.f32 %v73, %v79
      %83 = vst.msk [vmem:[#allocation5] sm:$0xff] %vm37, %v81
      %84 = vst.msk [vmem:[#allocation5 + $0x8] sm:$0xff] %vm37, %v82
      %v85 = vpack.c.bf16 %v82, %v81
      %v86 = vld [vmem:[%s3] sm:$0xf]
      %v87 = vld [vmem:[%s3 + $0x4] sm:$0xf]
      %v88 = vld [vmem:[%s3 + $0x8] sm:$0xf]
      %v89 = vld [vmem:[%s3 + $0xc] sm:$0xf]
      %v90 = vld [vmem:[%s4] sm:$0x1]
      %v92 = vlaneseq
      %v93 = vshrl.u32 %v92, 7
      %v94 = vsub.s32 0, %v93
      %v95 = vrot.slane %v90, %v94
      %v101 = vunpack.c.l.b16 %v86
      %v102 = vunpack.c.l.b16 %v87
      %v103 = vunpack.c.l.b16 %v88
      %v104 = vunpack.c.l.b16 %v89
      %v105 = vpack.c.b16 %v102, %v101
      %v106 = vpack.c.b16 %v104, %v103
      %v110 = vsel %vm37, %v85, 0
      %112 = vmatprep.subr.bf16.mxu0 0
      %113 = vmatpush1.bf16.msra.mxu0 %v105
      %114 = vmatprep.subr.bf16.mxu0 0
      %115 = vmatpush1.bf16.msra.mxu0 %v106
      %116 = vmatprep.subr.bf16.mxu0 0
      %117 = vmatpush1.bf16.msra.mxu0 0
      %118 = vmatprep.subr.bf16.mxu0 0
      %119 = vmatpush1.bf16.msra.mxu0 0
      %120 = vmatprep.subr.bf16.mxu0 0
      %121 = vmatpush1.bf16.msra.mxu0 0
      %122 = vmatprep.subr.bf16.mxu0 0
      %123 = vmatpush1.bf16.msra.mxu0 0
      %124 = vmatprep.subr.bf16.mxu0 0
      %125 = vmatpush1.bf16.msra.mxu0 0
      %126 = vmatprep.subr.bf16.mxu0 0
      %127 = vmatpush1.bf16.msra.mxu0 0
      %128 = vmatprep.subr.bf16.mxu0 0
      %129 = vmatpush1.bf16.msra.mxu0 0
      %130 = vmatprep.subr.bf16.mxu0 0
      %131 = vmatpush1.bf16.msra.mxu0 0
      %132 = vmatprep.subr.bf16.mxu0 0
      %133 = vmatpush1.bf16.msra.mxu0 0
      %134 = vmatprep.subr.bf16.mxu0 0
      %135 = vmatpush1.bf16.msra.mxu0 0
      %136 = vmatprep.subr.bf16.mxu0 0
      %137 = vmatpush1.bf16.msra.mxu0 0
      %138 = vmatprep.subr.bf16.mxu0 0
      %139 = vmatpush1.bf16.msra.mxu0 0
      %140 = vmatprep.subr.bf16.mxu0 0
      %141 = vmatpush1.bf16.msra.mxu0 0
      %142 = vmatprep.subr.bf16.mxu0 0
      %143 = vmatpush1.bf16.msra.mxu0 0
      %144 = vmatprep.mubr.bf16.mxu0 0
      %145 = vmatmul.mubr.bf16.gmra.mrb[0].mxu0 %v110
      %v146 = vpop.f32.mrb[0].mxu0
      %v147 = vadd.f32 %v95, %v146
      %v148 = vpop.f32.mrb[0].mxu0
      %v149 = vpop.f32.mrb[0].mxu0
      %v150 = vadd.f32 %v95, %v149
      %v151 = vpop.f32.mrb[0].mxu0
      %152 = vdwg.mxu0
      %v153 = vpack.c.bf16 %v150, %v147
      %154 = vst.msk [vmem:[#allocation2] sm:$0xff] %vm37, %v153
    $region33: #{transformer_lm_forward.13} parent=1 // pred_fallthru
      _
    %v155 = vld [vmem:[#allocation2] sm:$0xff]
    %v156 = vld [vmem:[%s5] sm:$0xf]
    %v157 = vld [vmem:[%s5 + $0x4] sm:$0xf]
    %v158 = vld [vmem:[%s5 + $0x8] sm:$0xf]
    %v159 = vld [vmem:[%s5 + $0xc] sm:$0xf]
    %v160 = vld [vmem:[%s6] sm:$0x1]
    %v162 = vlaneseq
    %v163 = vshrl.u32 %v162, 7
    %v164 = vsub.s32 0, %v163
    %v165 = vrot.slane %v160, %v164
    %v171 = vunpack.c.l.b16 %v156
    %v172 = vunpack.c.l.b16 %v157
    %v173 = vunpack.c.l.b16 %v158
    %v174 = vunpack.c.l.b16 %v159
    %v175 = vpack.c.b16 %v172, %v171
    %v176 = vpack.c.b16 %v174, %v173
    %vm179 = vcmask 261120
    %v181 = vsel %vm179, %v155, 0
    %183 = vmatprep.subr.bf16.mxu0 0
    %184 = vmatpush1.bf16.msra.mxu0 %v175
    %185 = vmatprep.subr.bf16.mxu0 0
    %186 = vmatpush1.bf16.msra.mxu0 %v176
    %187 = vmatprep.subr.bf16.mxu0 0
    %188 = vmatpush1.bf16.msra.mxu0 0
    %189 = vmatprep.subr.bf16.mxu0 0
    %190 = vmatpush1.bf16.msra.mxu0 0
    %191 = vmatprep.subr.bf16.mxu0 0
    %192 = vmatpush1.bf16.msra.mxu0 0
    %193 = vmatprep.subr.bf16.mxu0 0
    %194 = vmatpush1.bf16.msra.mxu0 0
    %195 = vmatprep.subr.bf16.mxu0 0
    %196 = vmatpush1.bf16.msra.mxu0 0
    %197 = vmatprep.subr.bf16.mxu0 0
    %198 = vmatpush1.bf16.msra.mxu0 0
    %199 = vmatprep.subr.bf16.mxu0 0
    %200 = vmatpush1.bf16.msra.mxu0 0
    %201 = vmatprep.subr.bf16.mxu0 0
    %202 = vmatpush1.bf16.msra.mxu0 0
    %203 = vmatprep.subr.bf16.mxu0 0
    %204 = vmatpush1.bf16.msra.mxu0 0
    %205 = vmatprep.subr.bf16.mxu0 0
    %206 = vmatpush1.bf16.msra.mxu0 0
    %207 = vmatprep.subr.bf16.mxu0 0
    %208 = vmatpush1.bf16.msra.mxu0 0
    %209 = vmatprep.subr.bf16.mxu0 0
    %210 = vmatpush1.bf16.msra.mxu0 0
    %211 = vmatprep.subr.bf16.mxu0 0
    %212 = vmatpush1.bf16.msra.mxu0 0
    %213 = vmatprep.subr.bf16.mxu0 0
    %214 = vmatpush1.bf16.msra.mxu0 0
    %215 = vmatprep.mubr.bf16.mxu0 0
    %216 = vmatmul.mubr.bf16.gmra.mrb[0].mxu0 %v181
    %v217 = vpop.f32.mrb[0].mxu0
    %v218 = vadd.f32 %v165, %v217
    %v219 = vpop.f32.mrb[0].mxu0
    %v220 = vpop.f32.mrb[0].mxu0
    %v221 = vadd.f32 %v165, %v220
    %v222 = vpop.f32.mrb[0].mxu0
    %223 = vdwg.mxu0
    %vm224 = vcmask 523264
    %225 = vst.msk [vmem:[#allocation3] sm:$0xff] %vm224, %v218
    %226 = vst.msk [vmem:[#allocation3 + $0x8] sm:$0xff] %vm224, %v221
    // Predicated region
    $region34: #{transformer_lm_forward.13} parent=1 // pred_check
      _
    $region35: #{transformer_lm_forward.13} parent=1 // pred_check_branch
      %228 = sbr.rel (0) target = $region37
    $region36: #{transformer_lm_forward.13} parent=1 // pred_region
      %s230 = ssub.s32 256, 256
      %231 = vsyncadd [#allocation4], %s230
      %s232 = sshll.u32 [#allocation3], 4
      %s233 = int_to_ptr.vmem [resolvable:$true] %s232
      %238 = dma.vmem_to_hbm [thread:$0]  %s233, 256, %s7, [#allocation4], 128, 128, 8
    $region37: #{transformer_lm_forward.13} parent=1 // pred_fallthru
      _
    // Predicated region
    $region38: #{transformer_lm_forward.13} parent=1 // pred_check
      _
    $region39: #{transformer_lm_forward.13} parent=1 // pred_check_branch
      %240 = sbr.rel (0) target = $region41
    $region40: #{transformer_lm_forward.13} parent=1 // pred_region
      %s242 = ssub.s32 256, 256
      %243 = vsyncadd [#allocation6], %s242
      %s244 = sshll.u32 [#allocation5], 4
      %s245 = int_to_ptr.vmem [resolvable:$true] %s244
      %250 = dma.vmem_to_hbm [thread:$0]  %s245, 256, %s8, [#allocation6], 128, 128, 8
    $region41: #{transformer_lm_forward.13} parent=1 // pred_fallthru
      _
    // Predicated region
    $region42: #{transformer_lm_forward.13} parent=1 // pred_check
      _
    $region43: #{transformer_lm_forward.13} parent=1 // pred_check_branch
      %252 = sbr.rel (0) target = $region45
    $region44: #{transformer_lm_forward.13} parent=1 // pred_region
      %253 = dma.done [#allocation4], 256
    $region45: #{transformer_lm_forward.13} parent=1 // pred_fallthru
      _
    // Predicated region
    $region46: #{transformer_lm_forward.13} parent=1 // pred_check
      _
    $region47: #{transformer_lm_forward.13} parent=1 // pred_check_branch
      %255 = sbr.rel (0) target = $region49
    $region48: #{transformer_lm_forward.13} parent=1 // pred_region
      %256 = dma.done [#allocation6], 256
    $region49: #{transformer_lm_forward.13} parent=1 // pred_fallthru
      _
    %257 = vsyncpa [#allocation4], 1
    %258 = vsyncpa [#allocation6], 1

// kernel: transformer_lm_forward.9
$region0: #{transformer_lm_forward.9}
  #allocation0 [shape = 'u32[]', space=smem, size = 0x4, offset = 0x4, fixed_abs, tag = 'smem constant byte address 0x4 - core index']
  #allocation1 [shape = 'u32[144,128]{1,0:T(1,128)}', space=vmem, size = 0x12000, scoped, tag = 'internal scratch']
  #allocation2 [shape = 'bf16[16,32]{1,0:T(16,128)(2,1)}', space=vmem, size = 0x1000, scoped, tag = 'scratch operand']
  #allocation3 [shape = 'f32[16,32]{1,0:T(8,128)}', space=vmem, size = 0x2000, scoped, tag = 'scratch operand']
  %s0 = inlined_call_operand.vmem [shape: f32[16,32], index: 0, kind: input, shape index: {}]
  %s1 = inlined_call_operand.vmem [shape: f32[1,32], index: 1, kind: input, shape index: {}]
  %s2 = inlined_call_operand.vmem [shape: f32[1,32], index: 2, kind: input, shape index: {}]
  %s3 = inlined_call_operand.vmem [shape: bf16[32,128], index: 3, kind: input, shape index: {}]
  %s4 = inlined_call_operand.vmem [shape: f32[1,128], index: 4, kind: input, shape index: {}]
  %s5 = inlined_call_operand.vmem [shape: bf16[128,32], index: 5, kind: input, shape index: {}]
  %s6 = inlined_call_operand.vmem [shape: f32[1,32], index: 6, kind: input, shape index: {}]
  %s7 = inlined_call_operand.vmem [shape: f32[16,32], index: 7, kind: output, shape index: {}]
  %s8 = sld [smem:[#allocation0]]
  $region46: #{transformer_lm_forward.9} parent=0
    _
  %s10 = ssub.s32 1, %s8
  %s11 = scalar_select 0, %s10, %s8
  // Predicated region
  $region2: #{transformer_lm_forward.9} parent=0 // pred_check
    _
  $region3: #{transformer_lm_forward.9} parent=0 // pred_check_branch
    %13 = sbr.rel (0) target = $region5
  $region4: #{transformer_lm_forward.9} parent=0 // pred_region
    _
  $region5: #{transformer_lm_forward.9} parent=0 // pred_fallthru
    _
  // Predicated region
  $region6: #{transformer_lm_forward.9} parent=0 // pred_check
    _
  $region7: #{transformer_lm_forward.9} parent=0 // pred_check_branch
    %15 = sbr.rel (0) target = $region9
  $region8: #{transformer_lm_forward.9} parent=0 // pred_region
    _
  $region9: #{transformer_lm_forward.9} parent=0 // pred_fallthru
    _
  // Predicated region
  $region10: #{transformer_lm_forward.9} parent=0 // pred_check
    _
  $region11: #{transformer_lm_forward.9} parent=0 // pred_check_branch
    %17 = sbr.rel (0) target = $region13
  $region12: #{transformer_lm_forward.9} parent=0 // pred_region
    _
  $region13: #{transformer_lm_forward.9} parent=0 // pred_fallthru
    _
  // Predicated region
  $region14: #{transformer_lm_forward.9} parent=0 // pred_check
    _
  $region15: #{transformer_lm_forward.9} parent=0 // pred_check_branch
    %19 = sbr.rel (0) target = $region17
  $region16: #{transformer_lm_forward.9} parent=0 // pred_region
    _
  $region17: #{transformer_lm_forward.9} parent=0 // pred_fallthru
    _
  // Predicated region
  $region18: #{transformer_lm_forward.9} parent=0 // pred_check
    _
  $region19: #{transformer_lm_forward.9} parent=0 // pred_check_branch
    %21 = sbr.rel (0) target = $region21
  $region20: #{transformer_lm_forward.9} parent=0 // pred_region
    _
  $region21: #{transformer_lm_forward.9} parent=0 // pred_fallthru
    _
  // Predicated region
  $region22: #{transformer_lm_forward.9} parent=0 // pred_check
    _
  $region23: #{transformer_lm_forward.9} parent=0 // pred_check_branch
    %23 = sbr.rel (0) target = $region25
  $region24: #{transformer_lm_forward.9} parent=0 // pred_region
    _
  $region25: #{transformer_lm_forward.9} parent=0 // pred_fallthru
    _
  // Predicated region
  $region26: #{transformer_lm_forward.9} parent=0 // pred_check
    _
  $region27: #{transformer_lm_forward.9} parent=0 // pred_check_branch
    %25 = sbr.rel (0) target = $region29
  $region28: #{transformer_lm_forward.9} parent=0 // pred_region
    _
  $region29: #{transformer_lm_forward.9} parent=0 // pred_fallthru
    _
  %p27 = scmp.eq.s32.totalorder 0, 0
  // Predicated region
  $region30: #{transformer_lm_forward.9} parent=0 // pred_check
    %p28 = pneg %p27
  $region31: #{transformer_lm_forward.9} parent=0 // pred_check_branch
    %30 = sbr.rel (%p28) target = $region33
  $region32: #{transformer_lm_forward.9} parent=0 // pred_region
    %v31 = vld [vmem:[%s0] sm:$0xff]
    %v32 = vld [vmem:[%s0 + $0x8] sm:$0xff]
    %vm33 = vcmask 261120
    %v34 = vsel %vm33, %v31, 0.0
    %35 = vadd.xlane.f32.xlu0 %v34
    %v36 = vpop.xlane.xlu0 %35
    %v37 = vsel %vm33, %v32, 0.0
    %38 = vadd.xlane.f32.xlu0 %v37
    %v39 = vpop.xlane.xlu0 %38
    %v40 = vrcp.pop 32.0
    %v41 = vmul.f32 %v36, %v40
    %v42 = vmul.f32 %v39, %v40
    %v43 = vsub.f32 %v31, %v41
    %v44 = vsub.f32 %v32, %v42
    %v45 = vmul.f32 %v43, %v43
    %v46 = vmul.f32 %v44, %v44
    %v47 = vsel %vm33, %v45, 0.0
    %48 = vadd.xlane.f32.xlu0 %v47
    %v49 = vpop.xlane.xlu0 %48
    %v50 = vsel %vm33, %v46, 0.0
    %51 = vadd.xlane.f32.xlu0 %v50
    %v52 = vpop.xlane.xlu0 %51
    %v53 = vrcp.pop 31.0
    %v54 = vmul.f32 %v49, %v53
    %v55 = vmul.f32 %v52, %v53
    %v56 = vld [vmem:[%s1] sm:$0x1]
    %v58 = vlaneseq
    %v59 = vshrl.u32 %v58, 7
    %v60 = vsub.s32 0, %v59
    %v61 = vrot.slane %v56, %v60
    %v63 = vmul.f32 %v61, %v43
    %v64 = vmul.f32 %v61, %v44
    %v65 = vrsqrt.pop %v54
    %v66 = vmul.f32 %v54, %v65
    %vm67 = vcmp.eq.f32.partialorder %v54, inf
    %v68 = vsel %vm67, %v54, %v66
    %vm69 = vcmp.eq.f32.partialorder %v54, 0.0
    %v70 = vand.u32 %v54, 2147483648
    %v71 = vsel %vm69, %v70, %v68
    %v72 = vrsqrt.pop %v55
    %v73 = vmul.f32 %v55, %v72
    %vm74 = vcmp.eq.f32.partialorder %v55, inf
    %v75 = vsel %vm74, %v55, %v73
    %vm76 = vcmp.eq.f32.partialorder %v55, 0.0
    %v77 = vand.u32 %v55, 2147483648
    %v78 = vsel %vm76, %v77, %v75
    %v79 = vadd.f32 %v71, 1e-06
    %v80 = vadd.f32 %v78, 1e-06
    %v81 = vrcp.pop %v79
    %v82 = vmul.f32 %v63, %v81
    %v83 = vrcp.pop %v80
    %v84 = vmul.f32 %v64, %v83
    %v85 = vld [vmem:[%s2] sm:$0x1]
    %v87 = vlaneseq
    %v88 = vshrl.u32 %v87, 7
    %v89 = vsub.s32 0, %v88
    %v90 = vrot.slane %v85, %v89
    %v92 = vadd.f32 %v82, %v90
    %v93 = vadd.f32 %v84, %v90
    %v94 = vpack.c.bf16 %v93, %v92
    %95 = vst.msk [vmem:[#allocation2] sm:$0xff] %vm33, %v94
    %96 = vst.msk [vmem:[#allocation3] sm:$0xff] %vm33, 0.0
    %97 = vst.msk [vmem:[#allocation3 + $0x8] sm:$0xff] %vm33, 0.0
  $region33: #{transformer_lm_forward.9} parent=0 // pred_fallthru
    _
  %v98 = vld [vmem:[#allocation2] sm:$0xff]
  %v99 = vld [vmem:[%s3] sm:$0xf]
  %v100 = vld [vmem:[%s3 + $0x4] sm:$0xf]
  %v101 = vld [vmem:[%s3 + $0x8] sm:$0xf]
  %v102 = vld [vmem:[%s3 + $0xc] sm:$0xf]
  %v103 = vld [vmem:[%s4] sm:$0x1]
  %v105 = vlaneseq
  %v106 = vshrl.u32 %v105, 7
  %v107 = vsub.s32 0, %v106
  %v108 = vrot.slane %v103, %v107
  %v114 = vunpack.c.l.b16 %v99
  %v115 = vunpack.c.l.b16 %v100
  %v116 = vunpack.c.l.b16 %v101
  %v117 = vunpack.c.l.b16 %v102
  %v118 = vpack.c.b16 %v115, %v114
  %v119 = vpack.c.b16 %v117, %v116
  %vm122 = vcmask 261120
  %v124 = vsel %vm122, %v98, 0
  %126 = vmatprep.subr.bf16.mxu0 0
  %127 = vmatpush1.bf16.msra.mxu0 %v118
  %128 = vmatprep.subr.bf16.mxu0 0
  %129 = vmatpush1.bf16.msra.mxu0 %v119
  %130 = vmatprep.subr.bf16.mxu0 0
  %131 = vmatpush1.bf16.msra.mxu0 0
  %132 = vmatprep.subr.bf16.mxu0 0
  %133 = vmatpush1.bf16.msra.mxu0 0
  %134 = vmatprep.subr.bf16.mxu0 0
  %135 = vmatpush1.bf16.msra.mxu0 0
  %136 = vmatprep.subr.bf16.mxu0 0
  %137 = vmatpush1.bf16.msra.mxu0 0
  %138 = vmatprep.subr.bf16.mxu0 0
  %139 = vmatpush1.bf16.msra.mxu0 0
  %140 = vmatprep.subr.bf16.mxu0 0
  %141 = vmatpush1.bf16.msra.mxu0 0
  %142 = vmatprep.subr.bf16.mxu0 0
  %143 = vmatpush1.bf16.msra.mxu0 0
  %144 = vmatprep.subr.bf16.mxu0 0
  %145 = vmatpush1.bf16.msra.mxu0 0
  %146 = vmatprep.subr.bf16.mxu0 0
  %147 = vmatpush1.bf16.msra.mxu0 0
  %148 = vmatprep.subr.bf16.mxu0 0
  %149 = vmatpush1.bf16.msra.mxu0 0
  %150 = vmatprep.subr.bf16.mxu0 0
  %151 = vmatpush1.bf16.msra.mxu0 0
  %152 = vmatprep.subr.bf16.mxu0 0
  %153 = vmatpush1.bf16.msra.mxu0 0
  %154 = vmatprep.subr.bf16.mxu0 0
  %155 = vmatpush1.bf16.msra.mxu0 0
  %156 = vmatprep.subr.bf16.mxu0 0
  %157 = vmatpush1.bf16.msra.mxu0 0
  %158 = vmatprep.mubr.bf16.mxu0 0
  %159 = vmatmul.mubr.bf16.gmra.mrb[0].mxu0 %v124
  %v160 = vpop.f32.mrb[0].mxu0
  %v161 = vadd.f32 %v108, %v160
  %v162 = vpop.f32.mrb[0].mxu0
  %v163 = vpop.f32.mrb[0].mxu0
  %v164 = vadd.f32 %v108, %v163
  %v165 = vpop.f32.mrb[0].mxu0
  %166 = vdwg.mxu0
  %v167 = vmax.f32 %v161, 0.0
  %v168 = vmax.f32 %v164, 0.0
  %v169 = vld [vmem:[#allocation3] sm:$0xff]
  %v170 = vld [vmem:[#allocation3 + $0x8] sm:$0xff]
  %v171 = vpack.c.bf16 %v168, %v167
  %v172 = vld [vmem:[%s5] sm:$0xf]
  %v173 = vld [vmem:[%s5 + $0x4] sm:$0xf]
  %v174 = vld [vmem:[%s5 + $0x8] sm:$0xf]
  %v175 = vld [vmem:[%s5 + $0xc] sm:$0xf]
  %v176 = vld [vmem:[%s5 + $0x10] sm:$0xf]
  %v177 = vld [vmem:[%s5 + $0x14] sm:$0xf]
  %v178 = vld [vmem:[%s5 + $0x18] sm:$0xf]
  %v179 = vld [vmem:[%s5 + $0x1c] sm:$0xf]
  %v180 = vld [vmem:[%s5 + $0x20] sm:$0xf]
  %v181 = vld [vmem:[%s5 + $0x24] sm:$0xf]
  %v182 = vld [vmem:[%s5 + $0x28] sm:$0xf]
  %v183 = vld [vmem:[%s5 + $0x2c] sm:$0xf]
  %v184 = vld [vmem:[%s5 + $0x30] sm:$0xf]
  %v185 = vld [vmem:[%s5 + $0x34] sm:$0xf]
  %v186 = vld [vmem:[%s5 + $0x38] sm:$0xf]
  %v187 = vld [vmem:[%s5 + $0x3c] sm:$0xf]
  %v204 = vunpack.c.l.b16 %v172
  %v205 = vunpack.c.l.b16 %v173
  %v206 = vunpack.c.l.b16 %v174
  %v207 = vunpack.c.l.b16 %v175
  %v208 = vunpack.c.l.b16 %v176
  %v209 = vunpack.c.l.b16 %v177
  %v210 = vunpack.c.l.b16 %v178
  %v211 = vunpack.c.l.b16 %v179
  %v212 = vunpack.c.l.b16 %v180
  %v213 = vunpack.c.l.b16 %v181
  %v214 = vunpack.c.l.b16 %v182
  %v215 = vunpack.c.l.b16 %v183
  %v216 = vunpack.c.l.b16 %v184
  %v217 = vunpack.c.l.b16 %v185
  %v218 = vunpack.c.l.b16 %v186
  %v219 = vunpack.c.l.b16 %v187
  %v220 = vpack.c.b16 %v205, %v204
  %v221 = vpack.c.b16 %v207, %v206
  %v222 = vpack.c.b16 %v209, %v208
  %v223 = vpack.c.b16 %v211, %v210
  %v224 = vpack.c.b16 %v213, %v212
  %v225 = vpack.c.b16 %v215, %v214
  %v226 = vpack.c.b16 %v217, %v216
  %v227 = vpack.c.b16 %v219, %v218
  %236 = vmatprep.subr.bf16.mxu0 0
  %237 = vmatpush1.bf16.msra.mxu0 %v220
  %238 = vmatprep.subr.bf16.mxu0 0
  %239 = vmatpush1.bf16.msra.mxu0 %v221
  %240 = vmatprep.subr.bf16.mxu0 0
  %241 = vmatpush1.bf16.msra.mxu0 %v222
  %242 = vmatprep.subr.bf16.mxu0 0
  %243 = vmatpush1.bf16.msra.mxu0 %v223
  %244 = vmatprep.subr.bf16.mxu0 0
  %245 = vmatpush1.bf16.msra.mxu0 %v224
  %246 = vmatprep.subr.bf16.mxu0 0
  %247 = vmatpush1.bf16.msra.mxu0 %v225
  %248 = vmatprep.subr.bf16.mxu0 0
  %249 = vmatpush1.bf16.msra.mxu0 %v226
  %250 = vmatprep.subr.bf16.mxu0 0
  %251 = vmatpush1.bf16.msra.mxu0 %v227
  %252 = vmatprep.subr.bf16.mxu0 0
  %253 = vmatpush1.bf16.msra.mxu0 0
  %254 = vmatprep.subr.bf16.mxu0 0
  %255 = vmatpush1.bf16.msra.mxu0 0
  %256 = vmatprep.subr.bf16.mxu0 0
  %257 = vmatpush1.bf16.msra.mxu0 0
  %258 = vmatprep.subr.bf16.mxu0 0
  %259 = vmatpush1.bf16.msra.mxu0 0
  %260 = vmatprep.subr.bf16.mxu0 0
  %261 = vmatpush1.bf16.msra.mxu0 0
  %262 = vmatprep.subr.bf16.mxu0 0
  %263 = vmatpush1.bf16.msra.mxu0 0
  %264 = vmatprep.subr.bf16.mxu0 0
  %265 = vmatpush1.bf16.msra.mxu0 0
  %266 = vmatprep.subr.bf16.mxu0 0
  %267 = vmatpush1.bf16.msra.mxu0 0
  %268 = vmatprep.mubr.bf16.mxu0 0
  %269 = vmatmul.mubr.bf16.gmra.mrb[0].mxu0 %v171
  %v270 = vpop.f32.mrb[0].mxu0
  %v271 = vadd.f32 0.0, %v270
  %v272 = vpop.f32.mrb[0].mxu0
  %v273 = vpop.f32.mrb[0].mxu0
  %v274 = vadd.f32 0.0, %v273
  %v275 = vpop.f32.mrb[0].mxu0
  %276 = vdwg.mxu0
  %v277 = vadd.f32 %v169, %v271
  %v278 = vadd.f32 %v170, %v274
  %279 = vst.msk [vmem:[#allocation3] sm:$0xff] %vm122, %v277
  %280 = vst.msk [vmem:[#allocation3 + $0x8] sm:$0xff] %vm122, %v278
  // Predicated region
  $region34: #{transformer_lm_forward.9} parent=0 // pred_check
    %p281 = pneg %p27
  $region35: #{transformer_lm_forward.9} parent=0 // pred_check_branch
    %283 = sbr.rel (%p281) target = $region37
  $region36: #{transformer_lm_forward.9} parent=0 // pred_region
    %v284 = vld [vmem:[%s0] sm:$0xff]
    %v285 = vld [vmem:[%s0 + $0x8] sm:$0xff]
    %v286 = vld [vmem:[#allocation3] sm:$0xff]
    %v287 = vld [vmem:[#allocation3 + $0x8] sm:$0xff]
    %v288 = vadd.f32 %v284, %v286
    %v289 = vadd.f32 %v285, %v287
    %v290 = vld [vmem:[%s6] sm:$0x1]
    %v292 = vlaneseq
    %v293 = vshrl.u32 %v292, 7
    %v294 = vsub.s32 0, %v293
    %v295 = vrot.slane %v290, %v294
    %v297 = vadd.f32 %v288, %v295
    %v298 = vadd.f32 %v289, %v295
    %299 = vst.msk [vmem:[%s7] sm:$0xff] %vm122, %v297
    %300 = vst.msk [vmem:[%s7 + $0x8] sm:$0xff] %vm122, %v298
  $region37: #{transformer_lm_forward.9} parent=0 // pred_fallthru
    _
  // Predicated region
  $region38: #{transformer_lm_forward.9} parent=0 // pred_check
    _
  $region39: #{transformer_lm_forward.9} parent=0 // pred_check_branch
    %302 = sbr.rel (0) target = $region41
  $region40: #{transformer_lm_forward.9} parent=0 // pred_region
    _
  $region41: #{transformer_lm_forward.9} parent=0 // pred_fallthru
    _
  // Predicated region
  $region42: #{transformer_lm_forward.9} parent=0 // pred_check
    _
  $region43: #{transformer_lm_forward.9} parent=0 // pred_check_branch
    %304 = sbr.rel (0) target = $region45
  $region44: #{transformer_lm_forward.9} parent=0 // pred_region
    _
  $region45: #{transformer_lm_forward.9} parent=0 // pred_fallthru
    _

</llo_original>
